<compile_context>
chip_gen: v5e
topology: v5e:2x2
jax: 0.10.0
libtpu: 0.0.40
codegen_flags: <defaults>
</compile_context>

<pallas_src>
import jax
import jax.numpy as jnp
from jax.experimental import pallas as pl
from jax.experimental.pallas import tpu as pltpu

LANE = 128
SUBLANE = 16  # bf16 LHS sublane packing granularity


def _round_up(n, m):
    return ((n + m - 1) // m) * m


def _cdiv(a, b):
    return -(-a // b)


def _pad2(a, rows, cols):
    r, c = a.shape
    return jnp.pad(a, ((0, rows - r), (0, cols - c)))


# ------------------------------- kernel --------------------------------------

def double_q_kernel(
    x_ref,                                   # (tm, in_p)   f32
    we_ref,                                  # (in_p, enc_p) f32 (encoder kept f32)
    w1c_ref,                                 # (enc_p, 2*Fp) bf16  fused qf1|qf2 layer 1
    w12_ref, w22_ref,                        # (Fp, Fp)      bf16
    w13_ref, w23_ref,                        # (Fp, Ap)      bf16
    b_ref,                                   # (8, W)        f32 bias slab
    out_ref,                                 # (tm, 2*Ap)    f32  q1 | q2
):
    enc_p = we_ref.shape[1]
    Fp = w12_ref.shape[0]
    Ap = w13_ref.shape[1]
    hdt = w1c_ref.dtype

    # Bias slab rows (all slices lane-aligned; widths are multiples of 128).
    b_e = b_ref[0:1, :enc_p]
    b_1c = b_ref[1:2, :2 * Fp]
    b_12 = b_ref[2:3, :Fp]
    b_22 = b_ref[3:4, :Fp]
    b_13 = b_ref[4:5, :Ap]
    b_23 = b_ref[5:6, :Ap]

    # encoder (f32 for precision; tiny fraction of FLOPs) + F.relu
    h = jnp.dot(x_ref[...], we_ref[...], preferred_element_type=jnp.float32) + b_e
    h = jnp.maximum(h, 0.0).astype(hdt)

    # Fused first layer of both heads (shared LHS): one matmul -> (tm, 2*Fp)
    t = jnp.dot(h, w1c_ref[...], preferred_element_type=jnp.float32) + b_1c
    t = jnp.maximum(t, 0.0).astype(hdt)
    t1 = t[:, :Fp]          # lane-aligned static slices (Fp is a multiple of 128)
    t2 = t[:, Fp:]

    # Second layer of each head
    u1 = jnp.dot(t1, w12_ref[...], preferred_element_type=jnp.float32) + b_12
    u1 = jnp.maximum(u1, 0.0).astype(hdt)
    u2 = jnp.dot(t2, w22_ref[...], preferred_element_type=jnp.float32) + b_22
    u2 = jnp.maximum(u2, 0.0).astype(hdt)

    # Final layers; fused lane-dense output (one 2*Ap-wide unmasked store).
    q1 = jnp.dot(u1, w13_ref[...], preferred_element_type=jnp.float32) + b_13
    q2 = jnp.dot(u2, w23_ref[...], preferred_element_type=jnp.float32) + b_23
    out_ref[...] = jnp.concatenate([q1, q2], axis=1)


# -------------------------- one-time weight prep ------------------------------

def prepare_params(params, *, head_dtype=jnp.bfloat16):
    """Pad / fuse / cast weights ONCE (keep the result; reuse for every forward)."""
    in_dim, enc_out = params["we"].shape
    F = params["w12"].shape[0]
    A = params["w13"].shape[1]

    in_p = _round_up(in_dim, LANE)
    enc_p = _round_up(enc_out, LANE)
    Fp = _round_up(F, LANE)
    Ap = _round_up(A, LANE)
    W = max(enc_p, 2 * Fp)

    we = _pad2(params["we"], in_p, enc_p).astype(jnp.float32)
    w1c = jnp.concatenate(
        [_pad2(params["w11"], enc_p, Fp), _pad2(params["w21"], enc_p, Fp)],
        axis=1).astype(head_dtype)
    w12 = _pad2(params["w12"], Fp, Fp).astype(head_dtype)
    w22 = _pad2(params["w22"], Fp, Fp).astype(head_dtype)
    w13 = _pad2(params["w13"], Fp, Ap).astype(head_dtype)
    w23 = _pad2(params["w23"], Fp, Ap).astype(head_dtype)

    # Consolidated bias slab: one (8, W) f32 array, one row per bias vector.
    bias = jnp.zeros((8, W), jnp.float32)
    bias = bias.at[0, :enc_out].set(params["be"][0])
    bias = bias.at[1, :F].set(params["b11"][0])
    bias = bias.at[1, Fp:Fp + F].set(params["b21"][0])
    bias = bias.at[2, :F].set(params["b12"][0])
    bias = bias.at[3, :F].set(params["b22"][0])
    bias = bias.at[4, :A].set(params["b13"][0])
    bias = bias.at[5, :A].set(params["b23"][0])

    dims = dict(in_dim=in_dim, A=A, in_p=in_p, enc_p=enc_p, Fp=Fp, Ap=Ap, W=W)
    return dict(we=we, w1c=w1c, w12=w12, w22=w22, w13=w13, w23=w23,
                bias=bias, dims=dims)


# ----------------------------- VMEM sizing ------------------------------------

def _physical_vmem_bytes():
    try:
        info = pltpu.get_tpu_info()
        return int(getattr(info, "vmem_capacity_bytes", 64 << 20))
    except Exception:
        return 64 << 20   # conservative: v7x per-TC VMEM


def _kernel_vmem_bytes(tm, d, weight_args, weight_bufs):
    w_bytes = sum(int(a.size) * a.dtype.itemsize for a in weight_args) * weight_bufs
    x_bytes = tm * d["in_p"] * 4 * 2                      # double-buffered x tile
    out_bytes = tm * 2 * d["Ap"] * 4 * 2                  # double-buffered output
    act_f32 = tm * (d["enc_p"] + 2 * d["Fp"] + 2 * d["Fp"] + 2 * d["Ap"]) * 4
    act_lp = tm * (d["enc_p"] + 2 * d["Fp"] + 2 * d["Fp"]) * 2   # bf16 copies
    return w_bytes + x_bytes + out_bytes + act_f32 + act_lp


def _pick_vmem_limit(kernel_bytes):
    limit = int(kernel_bytes * 1.3) + (6 << 20)   # headroom for Mosaic scratch/temps
    limit = max(limit, 16 << 20)                  # never below the scoped default
    return int(min(limit, _physical_vmem_bytes() * 3 // 4))


# ------------------------------- forward --------------------------------------

def double_q_forward(x, prep, *, tm_cap=256):
    """x: [B, in_dim] float32.  prep: output of prepare_params.  Returns (q1, q2)."""
    d = prep["dims"]
    in_p, enc_p, Fp, Ap = d["in_p"], d["enc_p"], d["Fp"], d["Ap"]
    A = d["A"]
    B = x.shape[0]

    # Adaptive batch tile: tiny batches are not padded to 128 rows; large batches
    # are split into >= 2 tiles (megacore on v7x) and capped at tm_cap (256).
    b16 = _round_up(max(B, 1), SUBLANE)
    if b16 <= 128:
        tm = b16
    else:
        tm = max(128, min(tm_cap, _round_up(_cdiv(b16, 2), SUBLANE)))
    Bp = _round_up(max(B, 1), tm)

    x_p = _pad2(x.astype(jnp.float32), Bp, in_p)

    weight_args = (prep["we"], prep["w1c"], prep["w12"], prep["w22"],
                   prep["w13"], prep["w23"], prep["bias"])

    grid = (Bp // tm,)
    batch_map = lambda i: (i, 0)
    resident_map = lambda i: (0, 0)

    def build_in_specs(weight_bufs):
        specs = [pl.BlockSpec((tm, in_p), batch_map)]
        for a in weight_args:
            if weight_bufs == 1:
                # constant index_map -> single buffer is enough (saves VMEM)
                specs.append(pl.BlockSpec(a.shape, resident_map,
                                          pipeline_mode=pl.Buffered(1)))
            else:
                specs.append(pl.BlockSpec(a.shape, resident_map))
        return specs

    out_spec = pl.BlockSpec((tm, 2 * Ap), batch_map)
    out_shape = jax.ShapeDtypeStruct((Bp, 2 * Ap), jnp.float32)

    flops = 2 * Bp * (in_p * enc_p + enc_p * 2 * Fp + 2 * Fp * Fp + 2 * Fp * Ap)
    w_bytes_once = sum(int(a.size) * a.dtype.itemsize for a in weight_args)
    cost = pl.CostEstimate(
        flops=flops, transcendentals=0,
        bytes_accessed=int(x_p.size) * 4 + w_bytes_once + Bp * 2 * Ap * 4)

    def run(weight_bufs):
        vmem_limit = _pick_vmem_limit(
            _kernel_vmem_bytes(tm, d, weight_args, weight_bufs))
        return pl.pallas_call(
            double_q_kernel,
            out_shape=out_shape,
            grid=grid,
            in_specs=build_in_specs(weight_bufs),
            out_specs=out_spec,
            compiler_params=pltpu.CompilerParams(
                dimension_semantics=("parallel",),
                vmem_limit_bytes=vmem_limit),
            cost_estimate=cost,
        )(x_p, *weight_args)

    try:
        q = run(1)          # resident weights single-buffered
    except Exception:
        q = run(2)          # fallback: default double buffering

    # Slice back to real batch / num_actions outside the kernel.
    return q[:B, :A], q[:B, Ap:Ap + A]


# ------------------------------ params & reference ----------------------------

def _init_linear(key, fan_in, fan_out):
    kw, kb = jax.random.split(key)
    bound = 1.0 / jnp.sqrt(fan_in)
    w = jax.random.uniform(kw, (fan_in, fan_out), jnp.float32, -bound, bound)
    b = jax.random.uniform(kb, (1, fan_out), jnp.float32, -bound, bound)
    return w, b


def init_params(key, in_dim, enc_out, num_features, num_actions):
    keys = jax.random.split(key, 7)
    p = {}
    p["we"], p["be"] = _init_linear(keys[0], in_dim, enc_out)
    p["w11"], p["b11"] = _init_linear(keys[1], enc_out, num_features)
    p["w12"], p["b12"] = _init_linear(keys[2], num_features, num_features)
    p["w13"], p["b13"] = _init_linear(keys[3], num_features, num_actions)
    p["w21"], p["b21"] = _init_linear(keys[4], enc_out, num_features)
    p["w22"], p["b22"] = _init_linear(keys[5], num_features, num_features)
    p["w23"], p["b23"] = _init_linear(keys[6], num_features, num_actions)
    return p


def reference_forward(x, p):
    def lin(h, w, b):
        return h @ w + b
    h = jnp.maximum(lin(x, p["we"], p["be"]), 0.0)
    t1 = jnp.maximum(lin(h, p["w11"], p["b11"]), 0.0)
    t1 = jnp.maximum(lin(t1, p["w12"], p["b12"]), 0.0)
    q1 = lin(t1, p["w13"], p["b13"])
    t2 = jnp.maximum(lin(h, p["w21"], p["b21"]), 0.0)
    t2 = jnp.maximum(lin(t2, p["w22"], p["b22"]), 0.0)
    q2 = lin(t2, p["w23"], p["b23"])
    return q1, q2


if __name__ == "__main__":
    # Small shapes consistent with the module: encoder.out_features=64,
    # num_features=128 (stand-in for the default 1024), num_actions=8.
    B, IN_DIM, ENC_OUT, NUM_FEATURES, NUM_ACTIONS = 8, 32, 64, 128, 8

    key = jax.random.PRNGKey(0)
    kx, kp = jax.random.split(key)
    x = jax.random.normal(kx, (B, IN_DIM), jnp.float32)
    params = init_params(kp, IN_DIM, ENC_OUT, NUM_FEATURES, NUM_ACTIONS)

    prep = prepare_params(params)               # one-time pad / fuse / bf16 cast
    q1, q2 = jax.block_until_ready(double_q_forward(x, prep))

    q1_ref, q2_ref = reference_forward(x, params)
    assert q1.shape == (B, NUM_ACTIONS) and q2.shape == (B, NUM_ACTIONS)
    # bf16 Q-head weights with f32 accumulation (encoder in f32) -> loose tol.
    assert jnp.allclose(q1, q1_ref, atol=1e-2, rtol=1e-2)
    assert jnp.allclose(q2, q2_ref, atol=1e-2, rtol=1e-2)

    print("KERNEL_OK")
</pallas_src>

<mosaic_0001>
module attributes {stable_mosaic.version = 11 : i64} {
  func.func @double_q_kernel(%arg0: i32, %arg1: memref<16x128xf32, #tpu.memory_space<vmem>>, %arg2: memref<128x128xf32, #tpu.memory_space<vmem>>, %arg3: memref<128x256xbf16, #tpu.memory_space<vmem>>, %arg4: memref<128x128xbf16, #tpu.memory_space<vmem>>, %arg5: memref<128x128xbf16, #tpu.memory_space<vmem>>, %arg6: memref<128x128xbf16, #tpu.memory_space<vmem>>, %arg7: memref<128x128xbf16, #tpu.memory_space<vmem>>, %arg8: memref<8x256xf32, #tpu.memory_space<vmem>>, %arg9: memref<16x256xf32, #tpu.memory_space<vmem>>) attributes {dimension_semantics = [#tpu.dimension_semantics<parallel>], iteration_bounds = array<i64: 1>, scalar_prefetch = 0 : i64, scratch_operands = 0 : i64, tpu.core_type = #tpu.core_type<tc>, window_params = [{transform_indices = @transform_0, window_bounds = array<i64: 16, 128>}, {pipeline_mode = #tpu.pipeline_mode<synchronous>, transform_indices = @transform_1, window_bounds = array<i64: 128, 128>}, {pipeline_mode = #tpu.pipeline_mode<synchronous>, transform_indices = @transform_2, window_bounds = array<i64: 128, 256>}, {pipeline_mode = #tpu.pipeline_mode<synchronous>, transform_indices = @transform_3, window_bounds = array<i64: 128, 128>}, {pipeline_mode = #tpu.pipeline_mode<synchronous>, transform_indices = @transform_4, window_bounds = array<i64: 128, 128>}, {pipeline_mode = #tpu.pipeline_mode<synchronous>, transform_indices = @transform_5, window_bounds = array<i64: 128, 128>}, {pipeline_mode = #tpu.pipeline_mode<synchronous>, transform_indices = @transform_6, window_bounds = array<i64: 128, 128>}, {pipeline_mode = #tpu.pipeline_mode<synchronous>, transform_indices = @transform_7, window_bounds = array<i64: 8, 256>}, {transform_indices = @transform_8, window_bounds = array<i64: 16, 256>}]} {
    %c0 = arith.constant 0 : index
    %c0_0 = arith.constant 0 : index
    %0 = vector.load %arg8[%c0, %c0_0] : memref<8x256xf32, #tpu.memory_space<vmem>>, vector<1x128xf32>
    %c1 = arith.constant 1 : index
    %c0_1 = arith.constant 0 : index
    %1 = vector.load %arg8[%c1, %c0_1] : memref<8x256xf32, #tpu.memory_space<vmem>>, vector<1x256xf32>
    %c2 = arith.constant 2 : index
    %c0_2 = arith.constant 0 : index
    %2 = vector.load %arg8[%c2, %c0_2] : memref<8x256xf32, #tpu.memory_space<vmem>>, vector<1x128xf32>
    %c3 = arith.constant 3 : index
    %c0_3 = arith.constant 0 : index
    %3 = vector.load %arg8[%c3, %c0_3] : memref<8x256xf32, #tpu.memory_space<vmem>>, vector<1x128xf32>
    %c4 = arith.constant 4 : index
    %c0_4 = arith.constant 0 : index
    %4 = vector.load %arg8[%c4, %c0_4] : memref<8x256xf32, #tpu.memory_space<vmem>>, vector<1x128xf32>
    %c5 = arith.constant 5 : index
    %c0_5 = arith.constant 0 : index
    %5 = vector.load %arg8[%c5, %c0_5] : memref<8x256xf32, #tpu.memory_space<vmem>>, vector<1x128xf32>
    %c0_6 = arith.constant 0 : index
    %c0_7 = arith.constant 0 : index
    %6 = vector.load %arg1[%c0_6, %c0_7] : memref<16x128xf32, #tpu.memory_space<vmem>>, vector<16x128xf32>
    %c0_8 = arith.constant 0 : index
    %c0_9 = arith.constant 0 : index
    %7 = vector.load %arg2[%c0_8, %c0_9] : memref<128x128xf32, #tpu.memory_space<vmem>>, vector<128x128xf32>
    %cst = arith.constant dense<0.000000e+00> : vector<16x128xf32>
    %8 = tpu.matmul %6, %7, %cst {dimension_numbers = #tpu.dot_dimension_numbers<[1], [0], [0], [1], [0, 0, 1, 1], [], []>} : vector<16x128xf32>, vector<128x128xf32>, vector<16x128xf32> -> vector<16x128xf32>
    %9 = vector.broadcast %0 : vector<1x128xf32> to vector<16x128xf32>
    %10 = arith.addf %8, %9 : vector<16x128xf32>
    %cst_10 = arith.constant 0.000000e+00 : f32
    %11 = vector.broadcast %cst_10 : f32 to vector<16x128xf32>
    %12 = arith.maximumf %10, %11 : vector<16x128xf32>
    %13 = arith.truncf %12 : vector<16x128xf32> to vector<16x128xbf16>
    %c0_11 = arith.constant 0 : index
    %c0_12 = arith.constant 0 : index
    %14 = vector.load %arg3[%c0_11, %c0_12] : memref<128x256xbf16, #tpu.memory_space<vmem>>, vector<128x256xbf16>
    %cst_13 = arith.constant dense<0.000000e+00> : vector<16x256xf32>
    %15 = tpu.matmul %13, %14, %cst_13 {dimension_numbers = #tpu.dot_dimension_numbers<[1], [0], [0], [1], [0, 0, 1, 1], [], []>} : vector<16x128xbf16>, vector<128x256xbf16>, vector<16x256xf32> -> vector<16x256xf32>
    %16 = vector.broadcast %1 : vector<1x256xf32> to vector<16x256xf32>
    %17 = arith.addf %15, %16 : vector<16x256xf32>
    %cst_14 = arith.constant 0.000000e+00 : f32
    %18 = vector.broadcast %cst_14 : f32 to vector<16x256xf32>
    %19 = arith.maximumf %17, %18 : vector<16x256xf32>
    %20 = arith.truncf %19 : vector<16x256xf32> to vector<16x256xbf16>
    %21 = vector.extract_strided_slice %20 {offsets = [0, 0], sizes = [16, 128], strides = [1, 1]} : vector<16x256xbf16> to vector<16x128xbf16>
    %22 = vector.extract_strided_slice %20 {offsets = [0, 128], sizes = [16, 128], strides = [1, 1]} : vector<16x256xbf16> to vector<16x128xbf16>
    %c0_15 = arith.constant 0 : index
    %c0_16 = arith.constant 0 : index
    %23 = vector.load %arg4[%c0_15, %c0_16] : memref<128x128xbf16, #tpu.memory_space<vmem>>, vector<128x128xbf16>
    %cst_17 = arith.constant dense<0.000000e+00> : vector<16x128xf32>
    %24 = tpu.matmul %21, %23, %cst_17 {dimension_numbers = #tpu.dot_dimension_numbers<[1], [0], [0], [1], [0, 0, 1, 1], [], []>} : vector<16x128xbf16>, vector<128x128xbf16>, vector<16x128xf32> -> vector<16x128xf32>
    %25 = vector.broadcast %2 : vector<1x128xf32> to vector<16x128xf32>
    %26 = arith.addf %24, %25 : vector<16x128xf32>
    %cst_18 = arith.constant 0.000000e+00 : f32
    %27 = vector.broadcast %cst_18 : f32 to vector<16x128xf32>
    %28 = arith.maximumf %26, %27 : vector<16x128xf32>
    %29 = arith.truncf %28 : vector<16x128xf32> to vector<16x128xbf16>
    %c0_19 = arith.constant 0 : index
    %c0_20 = arith.constant 0 : index
    %30 = vector.load %arg5[%c0_19, %c0_20] : memref<128x128xbf16, #tpu.memory_space<vmem>>, vector<128x128xbf16>
    %cst_21 = arith.constant dense<0.000000e+00> : vector<16x128xf32>
    %31 = tpu.matmul %22, %30, %cst_21 {dimension_numbers = #tpu.dot_dimension_numbers<[1], [0], [0], [1], [0, 0, 1, 1], [], []>} : vector<16x128xbf16>, vector<128x128xbf16>, vector<16x128xf32> -> vector<16x128xf32>
    %32 = vector.broadcast %3 : vector<1x128xf32> to vector<16x128xf32>
    %33 = arith.addf %31, %32 : vector<16x128xf32>
    %cst_22 = arith.constant 0.000000e+00 : f32
    %34 = vector.broadcast %cst_22 : f32 to vector<16x128xf32>
    %35 = arith.maximumf %33, %34 : vector<16x128xf32>
    %36 = arith.truncf %35 : vector<16x128xf32> to vector<16x128xbf16>
    %c0_23 = arith.constant 0 : index
    %c0_24 = arith.constant 0 : index
    %37 = vector.load %arg6[%c0_23, %c0_24] : memref<128x128xbf16, #tpu.memory_space<vmem>>, vector<128x128xbf16>
    %cst_25 = arith.constant dense<0.000000e+00> : vector<16x128xf32>
    %38 = tpu.matmul %29, %37, %cst_25 {dimension_numbers = #tpu.dot_dimension_numbers<[1], [0], [0], [1], [0, 0, 1, 1], [], []>} : vector<16x128xbf16>, vector<128x128xbf16>, vector<16x128xf32> -> vector<16x128xf32>
    %39 = vector.broadcast %4 : vector<1x128xf32> to vector<16x128xf32>
    %40 = arith.addf %38, %39 : vector<16x128xf32>
    %c0_26 = arith.constant 0 : index
    %c0_27 = arith.constant 0 : index
    %41 = vector.load %arg7[%c0_26, %c0_27] : memref<128x128xbf16, #tpu.memory_space<vmem>>, vector<128x128xbf16>
    %cst_28 = arith.constant dense<0.000000e+00> : vector<16x128xf32>
    %42 = tpu.matmul %36, %41, %cst_28 {dimension_numbers = #tpu.dot_dimension_numbers<[1], [0], [0], [1], [0, 0, 1, 1], [], []>} : vector<16x128xbf16>, vector<128x128xbf16>, vector<16x128xf32> -> vector<16x128xf32>
    %43 = vector.broadcast %5 : vector<1x128xf32> to vector<16x128xf32>
    %44 = arith.addf %42, %43 : vector<16x128xf32>
    %45 = tpu.concatenate %40, %44 in 1 : vector<16x128xf32>, vector<16x128xf32> -> vector<16x256xf32>
    %c0_29 = arith.constant 0 : index
    %c0_30 = arith.constant 0 : index
    %46 = vector.load %arg9[%c0_29, %c0_30] : memref<16x256xf32, #tpu.memory_space<vmem>>, vector<16x256xf32>
    tpu.vector_store %arg9[%c0_29, %c0_30], %45 {strides = array<i32>} : memref<16x256xf32, #tpu.memory_space<vmem>>, vector<16x256xf32>,
    return
  }
  func.func @transform_0(%arg0: i32) -> (i32, i32) {
    %c0_i32 = arith.constant 0 : i32
    %c0_i32_0 = arith.constant 0 : i32
    return %arg0, %c0_i32 : i32, i32
  }
  func.func @transform_1(%arg0: i32) -> (i32, i32) {
    %c0_i32 = arith.constant 0 : i32
    %c0_i32_0 = arith.constant 0 : i32
    %c0_i32_1 = arith.constant 0 : i32
    return %c0_i32, %c0_i32_0 : i32, i32
  }
  func.func @transform_2(%arg0: i32) -> (i32, i32) {
    %c0_i32 = arith.constant 0 : i32
    %c0_i32_0 = arith.constant 0 : i32
    %c0_i32_1 = arith.constant 0 : i32
    return %c0_i32, %c0_i32_0 : i32, i32
  }
  func.func @transform_3(%arg0: i32) -> (i32, i32) {
    %c0_i32 = arith.constant 0 : i32
    %c0_i32_0 = arith.constant 0 : i32
    %c0_i32_1 = arith.constant 0 : i32
    return %c0_i32, %c0_i32_0 : i32, i32
  }
  func.func @transform_4(%arg0: i32) -> (i32, i32) {
    %c0_i32 = arith.constant 0 : i32
    %c0_i32_0 = arith.constant 0 : i32
    %c0_i32_1 = arith.constant 0 : i32
    return %c0_i32, %c0_i32_0 : i32, i32
  }
  func.func @transform_5(%arg0: i32) -> (i32, i32) {
    %c0_i32 = arith.constant 0 : i32
    %c0_i32_0 = arith.constant 0 : i32
    %c0_i32_1 = arith.constant 0 : i32
    return %c0_i32, %c0_i32_0 : i32, i32
  }
  func.func @transform_6(%arg0: i32) -> (i32, i32) {
    %c0_i32 = arith.constant 0 : i32
    %c0_i32_0 = arith.constant 0 : i32
    %c0_i32_1 = arith.constant 0 : i32
    return %c0_i32, %c0_i32_0 : i32, i32
  }
  func.func @transform_7(%arg0: i32) -> (i32, i32) {
    %c0_i32 = arith.constant 0 : i32
    %c0_i32_0 = arith.constant 0 : i32
    %c0_i32_1 = arith.constant 0 : i32
    return %c0_i32, %c0_i32_0 : i32, i32
  }
  func.func @transform_8(%arg0: i32) -> (i32, i32) {
    %c0_i32 = arith.constant 0 : i32
    %c0_i32_0 = arith.constant 0 : i32
    return %arg0, %c0_i32 : i32, i32
  }
}

module attributes {stable_mosaic.version = 11 : i64} {
  func.func @double_q_kernel(%arg0: i32, %arg1: memref<16x128xf32, #tpu.memory_space<vmem>>, %arg2: memref<128x128xf32, #tpu.memory_space<vmem>>, %arg3: memref<128x256xbf16, #tpu.memory_space<vmem>>, %arg4: memref<128x128xbf16, #tpu.memory_space<vmem>>, %arg5: memref<128x128xbf16, #tpu.memory_space<vmem>>, %arg6: memref<128x128xbf16, #tpu.memory_space<vmem>>, %arg7: memref<128x128xbf16, #tpu.memory_space<vmem>>, %arg8: memref<8x256xf32, #tpu.memory_space<vmem>>, %arg9: memref<16x256xf32, #tpu.memory_space<vmem>>) attributes {dimension_semantics = [#tpu.dimension_semantics<parallel>], iteration_bounds = array<i64: 1>, scalar_prefetch = 0 : i64, scratch_operands = 0 : i64, tpu.core_type = #tpu.core_type<tc>, window_params = [{transform_indices = @transform_0, window_bounds = array<i64: 16, 128>}, {pipeline_mode = #tpu.pipeline_mode<synchronous>, transform_indices = @transform_1, window_bounds = array<i64: 128, 128>}, {pipeline_mode = #tpu.pipeline_mode<synchronous>, transform_indices = @transform_2, window_bounds = array<i64: 128, 256>}, {pipeline_mode = #tpu.pipeline_mode<synchronous>, transform_indices = @transform_3, window_bounds = array<i64: 128, 128>}, {pipeline_mode = #tpu.pipeline_mode<synchronous>, transform_indices = @transform_4, window_bounds = array<i64: 128, 128>}, {pipeline_mode = #tpu.pipeline_mode<synchronous>, transform_indices = @transform_5, window_bounds = array<i64: 128, 128>}, {pipeline_mode = #tpu.pipeline_mode<synchronous>, transform_indices = @transform_6, window_bounds = array<i64: 128, 128>}, {pipeline_mode = #tpu.pipeline_mode<synchronous>, transform_indices = @transform_7, window_bounds = array<i64: 8, 256>}, {transform_indices = @transform_8, window_bounds = array<i64: 16, 256>}]} {
    %c0 = arith.constant 0 : index
    %c0_0 = arith.constant 0 : index
    %0 = vector.load %arg8[%c0, %c0_0] : memref<8x256xf32, #tpu.memory_space<vmem>>, vector<1x128xf32>
    %c1 = arith.constant 1 : index
    %c0_1 = arith.constant 0 : index
    %1 = vector.load %arg8[%c1, %c0_1] : memref<8x256xf32, #tpu.memory_space<vmem>>, vector<1x256xf32>
    %c2 = arith.constant 2 : index
    %c0_2 = arith.constant 0 : index
    %2 = vector.load %arg8[%c2, %c0_2] : memref<8x256xf32, #tpu.memory_space<vmem>>, vector<1x128xf32>
    %c3 = arith.constant 3 : index
    %c0_3 = arith.constant 0 : index
    %3 = vector.load %arg8[%c3, %c0_3] : memref<8x256xf32, #tpu.memory_space<vmem>>, vector<1x128xf32>
    %c4 = arith.constant 4 : index
    %c0_4 = arith.constant 0 : index
    %4 = vector.load %arg8[%c4, %c0_4] : memref<8x256xf32, #tpu.memory_space<vmem>>, vector<1x128xf32>
    %c5 = arith.constant 5 : index
    %c0_5 = arith.constant 0 : index
    %5 = vector.load %arg8[%c5, %c0_5] : memref<8x256xf32, #tpu.memory_space<vmem>>, vector<1x128xf32>
    %c0_6 = arith.constant 0 : index
    %c0_7 = arith.constant 0 : index
    %6 = vector.load %arg1[%c0_6, %c0_7] : memref<16x128xf32, #tpu.memory_space<vmem>>, vector<16x128xf32>
    %c0_8 = arith.constant 0 : index
    %c0_9 = arith.constant 0 : index
    %7 = vector.load %arg2[%c0_8, %c0_9] : memref<128x128xf32, #tpu.memory_space<vmem>>, vector<128x128xf32>
    %cst = arith.constant dense<0.000000e+00> : vector<16x128xf32>
    %8 = tpu.matmul %6, %7, %cst {dimension_numbers = #tpu.dot_dimension_numbers<[1], [0], [0], [1], [0, 0, 1, 1], [], []>} : vector<16x128xf32>, vector<128x128xf32>, vector<16x128xf32> -> vector<16x128xf32>
    %9 = vector.broadcast %0 : vector<1x128xf32> to vector<16x128xf32>
    %10 = arith.addf %8, %9 : vector<16x128xf32>
    %cst_10 = arith.constant 0.000000e+00 : f32
    %11 = vector.broadcast %cst_10 : f32 to vector<16x128xf32>
    %12 = arith.maximumf %10, %11 : vector<16x128xf32>
    %13 = arith.truncf %12 : vector<16x128xf32> to vector<16x128xbf16>
    %c0_11 = arith.constant 0 : index
    %c0_12 = arith.constant 0 : index
    %14 = vector.load %arg3[%c0_11, %c0_12] : memref<128x256xbf16, #tpu.memory_space<vmem>>, vector<128x256xbf16>
    %cst_13 = arith.constant dense<0.000000e+00> : vector<16x256xf32>
    %15 = tpu.matmul %13, %14, %cst_13 {dimension_numbers = #tpu.dot_dimension_numbers<[1], [0], [0], [1], [0, 0, 1, 1], [], []>} : vector<16x128xbf16>, vector<128x256xbf16>, vector<16x256xf32> -> vector<16x256xf32>
    %16 = vector.broadcast %1 : vector<1x256xf32> to vector<16x256xf32>
    %17 = arith.addf %15, %16 : vector<16x256xf32>
    %cst_14 = arith.constant 0.000000e+00 : f32
    %18 = vector.broadcast %cst_14 : f32 to vector<16x256xf32>
    %19 = arith.maximumf %17, %18 : vector<16x256xf32>
    %20 = arith.truncf %19 : vector<16x256xf32> to vector<16x256xbf16>
    %21 = vector.extract_strided_slice %20 {offsets = [0, 0], sizes = [16, 128], strides = [1, 1]} : vector<16x256xbf16> to vector<16x128xbf16>
    %22 = vector.extract_strided_slice %20 {offsets = [0, 128], sizes = [16, 128], strides = [1, 1]} : vector<16x256xbf16> to vector<16x128xbf16>
    %c0_15 = arith.constant 0 : index
    %c0_16 = arith.constant 0 : index
    %23 = vector.load %arg4[%c0_15, %c0_16] : memref<128x128xbf16, #tpu.memory_space<vmem>>, vector<128x128xbf16>
    %cst_17 = arith.constant dense<0.000000e+00> : vector<16x128xf32>
    %24 = tpu.matmul %21, %23, %cst_17 {dimension_numbers = #tpu.dot_dimension_numbers<[1], [0], [0], [1], [0, 0, 1, 1], [], []>} : vector<16x128xbf16>, vector<128x128xbf16>, vector<16x128xf32> -> vector<16x128xf32>
    %25 = vector.broadcast %2 : vector<1x128xf32> to vector<16x128xf32>
    %26 = arith.addf %24, %25 : vector<16x128xf32>
    %cst_18 = arith.constant 0.000000e+00 : f32
    %27 = vector.broadcast %cst_18 : f32 to vector<16x128xf32>
    %28 = arith.maximumf %26, %27 : vector<16x128xf32>
    %29 = arith.truncf %28 : vector<16x128xf32> to vector<16x128xbf16>
    %c0_19 = arith.constant 0 : index
    %c0_20 = arith.constant 0 : index
    %30 = vector.load %arg5[%c0_19, %c0_20] : memref<128x128xbf16, #tpu.memory_space<vmem>>, vector<128x128xbf16>
    %cst_21 = arith.constant dense<0.000000e+00> : vector<16x128xf32>
    %31 = tpu.matmul %22, %30, %cst_21 {dimension_numbers = #tpu.dot_dimension_numbers<[1], [0], [0], [1], [0, 0, 1, 1], [], []>} : vector<16x128xbf16>, vector<128x128xbf16>, vector<16x128xf32> -> vector<16x128xf32>
    %32 = vector.broadcast %3 : vector<1x128xf32> to vector<16x128xf32>
    %33 = arith.addf %31, %32 : vector<16x128xf32>
    %cst_22 = arith.constant 0.000000e+00 : f32
    %34 = vector.broadcast %cst_22 : f32 to vector<16x128xf32>
    %35 = arith.maximumf %33, %34 : vector<16x128xf32>
    %36 = arith.truncf %35 : vector<16x128xf32> to vector<16x128xbf16>
    %c0_23 = arith.constant 0 : index
    %c0_24 = arith.constant 0 : index
    %37 = vector.load %arg6[%c0_23, %c0_24] : memref<128x128xbf16, #tpu.memory_space<vmem>>, vector<128x128xbf16>
    %cst_25 = arith.constant dense<0.000000e+00> : vector<16x128xf32>
    %38 = tpu.matmul %29, %37, %cst_25 {dimension_numbers = #tpu.dot_dimension_numbers<[1], [0], [0], [1], [0, 0, 1, 1], [], []>} : vector<16x128xbf16>, vector<128x128xbf16>, vector<16x128xf32> -> vector<16x128xf32>
    %39 = vector.broadcast %4 : vector<1x128xf32> to vector<16x128xf32>
    %40 = arith.addf %38, %39 : vector<16x128xf32>
    %c0_26 = arith.constant 0 : index
    %c0_27 = arith.constant 0 : index
    %41 = vector.load %arg7[%c0_26, %c0_27] : memref<128x128xbf16, #tpu.memory_space<vmem>>, vector<128x128xbf16>
    %cst_28 = arith.constant dense<0.000000e+00> : vector<16x128xf32>
    %42 = tpu.matmul %36, %41, %cst_28 {dimension_numbers = #tpu.dot_dimension_numbers<[1], [0], [0], [1], [0, 0, 1, 1], [], []>} : vector<16x128xbf16>, vector<128x128xbf16>, vector<16x128xf32> -> vector<16x128xf32>
    %43 = vector.broadcast %5 : vector<1x128xf32> to vector<16x128xf32>
    %44 = arith.addf %42, %43 : vector<16x128xf32>
    %45 = tpu.concatenate %40, %44 in 1 : vector<16x128xf32>, vector<16x128xf32> -> vector<16x256xf32>
    %c0_29 = arith.constant 0 : index
    %c0_30 = arith.constant 0 : index
    %46 = vector.load %arg9[%c0_29, %c0_30] : memref<16x256xf32, #tpu.memory_space<vmem>>, vector<16x256xf32>
    tpu.vector_store %arg9[%c0_29, %c0_30], %45 {strides = array<i32>} : memref<16x256xf32, #tpu.memory_space<vmem>>, vector<16x256xf32>,
    return
  }
  func.func @transform_0(%arg0: i32) -> (i32, i32) {
    %c0_i32 = arith.constant 0 : i32
    %c0_i32_0 = arith.constant 0 : i32
    return %arg0, %c0_i32 : i32, i32
  }
  func.func @transform_1(%arg0: i32) -> (i32, i32) {
    %c0_i32 = arith.constant 0 : i32
    %c0_i32_0 = arith.constant 0 : i32
    %c0_i32_1 = arith.constant 0 : i32
    return %c0_i32, %c0_i32_0 : i32, i32
  }
  func.func @transform_2(%arg0: i32) -> (i32, i32) {
    %c0_i32 = arith.constant 0 : i32
    %c0_i32_0 = arith.constant 0 : i32
    %c0_i32_1 = arith.constant 0 : i32
    return %c0_i32, %c0_i32_0 : i32, i32
  }
  func.func @transform_3(%arg0: i32) -> (i32, i32) {
    %c0_i32 = arith.constant 0 : i32
    %c0_i32_0 = arith.constant 0 : i32
    %c0_i32_1 = arith.constant 0 : i32
    return %c0_i32, %c0_i32_0 : i32, i32
  }
  func.func @transform_4(%arg0: i32) -> (i32, i32) {
    %c0_i32 = arith.constant 0 : i32
    %c0_i32_0 = arith.constant 0 : i32
    %c0_i32_1 = arith.constant 0 : i32
    return %c0_i32, %c0_i32_0 : i32, i32
  }
  func.func @transform_5(%arg0: i32) -> (i32, i32) {
    %c0_i32 = arith.constant 0 : i32
    %c0_i32_0 = arith.constant 0 : i32
    %c0_i32_1 = arith.constant 0 : i32
    return %c0_i32, %c0_i32_0 : i32, i32
  }
  func.func @transform_6(%arg0: i32) -> (i32, i32) {
    %c0_i32 = arith.constant 0 : i32
    %c0_i32_0 = arith.constant 0 : i32
    %c0_i32_1 = arith.constant 0 : i32
    return %c0_i32, %c0_i32_0 : i32, i32
  }
  func.func @transform_7(%arg0: i32) -> (i32, i32) {
    %c0_i32 = arith.constant 0 : i32
    %c0_i32_0 = arith.constant 0 : i32
    %c0_i32_1 = arith.constant 0 : i32
    return %c0_i32, %c0_i32_0 : i32, i32
  }
  func.func @transform_8(%arg0: i32) -> (i32, i32) {
    %c0_i32 = arith.constant 0 : i32
    %c0_i32_0 = arith.constant 0 : i32
    return %arg0, %c0_i32 : i32, i32
  }
}

</mosaic_0001>

<llo_original>
// kernel: tpu_custom_call.1
$region0: #{tpu_custom_call.1}
  #allocation0 [shape = 'u32[]', space=smem, size = 0x4, offset = 0x4, fixed_abs, tag = 'smem constant byte address 0x4 - core index']
  #allocation1 [shape = 'u32[72,128]{1,0:T(1,128)}', space=vmem, size = 0x9000, scoped, tag = 'internal scratch']
  %s0 = inlined_call_operand.hbm [shape: f32[16,128], index: 0, kind: input, shape index: {}]
  %s1 = inlined_call_operand.hbm [shape: f32[128,128], index: 1, kind: input, shape index: {}]
  %s2 = inlined_call_operand.hbm [shape: bf16[128,256], index: 2, kind: input, shape index: {}]
  %s3 = inlined_call_operand.hbm [shape: bf16[128,128], index: 3, kind: input, shape index: {}]
  %s4 = inlined_call_operand.hbm [shape: bf16[128,128], index: 4, kind: input, shape index: {}]
  %s5 = inlined_call_operand.hbm [shape: bf16[128,128], index: 5, kind: input, shape index: {}]
  %s6 = inlined_call_operand.hbm [shape: bf16[128,128], index: 6, kind: input, shape index: {}]
  %s7 = inlined_call_operand.hbm [shape: f32[8,256], index: 7, kind: input, shape index: {}]
  %s8 = inlined_call_operand.hbm [shape: f32[16,256], index: 8, kind: output, shape index: {}]
  %s9 = sld [smem:[#allocation0]]
  $region74: #{tpu_custom_call.1} parent=0
    _
  %s11 = ssub.s32 1, %s9
  %s12 = scalar_select 0, %s11, %s9
  $region1: #{tpu_custom_call.1} parent=0
    #allocation2 [shape = 'u8[8192]{0}', space=vmem, size = 0x2000, scoped, tag = 'input window, operand 0, single buffered']
    #allocation3 [shape = 's32[1]{0}', space=sflag, size = 0x4, scoped, tag = 'scoped memory for tpu_custom_call.1']
    #allocation4 [shape = 's32[1]{0}', space=sflag, size = 0x4, scoped, tag = 'scoped memory for tpu_custom_call.1']
    #allocation5 [shape = 'u8[65536]{0}', space=vmem, size = 0x10000, scoped, tag = 'input window, operand 1, single buffered']
    #allocation6 [shape = 's32[1]{0}', space=sflag, size = 0x4, scoped, tag = 'scoped memory for tpu_custom_call.1']
    #allocation7 [shape = 'u8[65536]{0}', space=vmem, size = 0x10000, scoped, tag = 'input window, operand 2, single buffered']
    #allocation8 [shape = 'u8[32768]{0}', space=vmem, size = 0x8000, scoped, tag = 'input window, operand 3, single buffered']
    #allocation9 [shape = 's32[1]{0}', space=sflag, size = 0x4, scoped, tag = 'scoped memory for tpu_custom_call.1']
    #allocation10 [shape = 'u8[32768]{0}', space=vmem, size = 0x8000, scoped, tag = 'input window, operand 4, single buffered']
    #allocation11 [shape = 'u8[32768]{0}', space=vmem, size = 0x8000, scoped, tag = 'input window, operand 5, single buffered']
    #allocation12 [shape = 's32[1]{0}', space=sflag, size = 0x4, scoped, tag = 'scoped memory for tpu_custom_call.1']
    #allocation13 [shape = 'u8[32768]{0}', space=vmem, size = 0x8000, scoped, tag = 'input window, operand 6, single buffered']
    #allocation14 [shape = 'u8[8192]{0}', space=vmem, size = 0x2000, scoped, tag = 'input window, operand 7, single buffered']
    #allocation15 [shape = 's32[1]{0}', space=sflag, size = 0x4, scoped, tag = 'scoped memory for tpu_custom_call.1']
    #allocation16 [shape = 'u8[16384]{0}', space=vmem, size = 0x4000, scoped, tag = 'output window, operand 0, single buffered']
    %13 = vsyncpa [#allocation3], 0
    %14 = vsyncpa [#allocation6], 0
    %15 = vsyncpa [#allocation9], 0
    %16 = vsyncpa [#allocation12], 0
    %17 = vsyncpa [#allocation15], 0
    %18 = vsyncpa [#allocation4], 0
    // Predicated region
    $region2: #{tpu_custom_call.1} parent=1 // pred_check
      _
    $region3: #{tpu_custom_call.1} parent=1 // pred_check_branch
      %20 = sbr.rel (0) target = $region5
    $region4: #{tpu_custom_call.1} parent=1 // pred_region
      %22 = vsyncadd [#allocation3], 0
      %s23 = sshll.u32 %s0, 4
      %s24 = int_to_ptr.hbm [resolvable:$true] %s23
      %s25 = sshll.u32 [#allocation2], 4
      %s26 = int_to_ptr.vmem [resolvable:$true] %s25
      %31 = dma.hbm_to_vmem [thread:$0]  %s24, 256, %s26, [#allocation3], 128, 128, 8
    $region5: #{tpu_custom_call.1} parent=1 // pred_fallthru
      _
    // Predicated region
    $region6: #{tpu_custom_call.1} parent=1 // pred_check
      _
    $region7: #{tpu_custom_call.1} parent=1 // pred_check_branch
      %33 = sbr.rel (0) target = $region9
    $region8: #{tpu_custom_call.1} parent=1 // pred_region
      %35 = vsyncadd [#allocation6], 0
      %s36 = sshll.u32 %s1, 4
      %s37 = int_to_ptr.hbm [resolvable:$true] %s36
      %s38 = sshll.u32 [#allocation5], 4
      %s39 = int_to_ptr.vmem [resolvable:$true] %s38
      %44 = dma.hbm_to_vmem [thread:$0]  %s37, 2048, %s39, [#allocation6], 128, 128, 8
    $region9: #{tpu_custom_call.1} parent=1 // pred_fallthru
      _
    // Predicated region
    $region10: #{tpu_custom_call.1} parent=1 // pred_check
      _
    $region11: #{tpu_custom_call.1} parent=1 // pred_check_branch
      %46 = sbr.rel (0) target = $region13
    $region12: #{tpu_custom_call.1} parent=1 // pred_region
      %48 = vsyncadd [#allocation6], 0
      %s49 = sshll.u32 %s2, 4
      %s50 = int_to_ptr.hbm [resolvable:$true] %s49
      %s51 = sshll.u32 [#allocation7], 4
      %s52 = int_to_ptr.vmem [resolvable:$true] %s51
      %57 = dma.hbm_to_vmem [thread:$0]  %s50, 2048, %s52, [#allocation6], 128, 128, 8
    $region13: #{tpu_custom_call.1} parent=1 // pred_fallthru
      _
    // Predicated region
    $region14: #{tpu_custom_call.1} parent=1 // pred_check
      _
    $region15: #{tpu_custom_call.1} parent=1 // pred_check_branch
      %59 = sbr.rel (0) target = $region17
    $region16: #{tpu_custom_call.1} parent=1 // pred_region
      %61 = vsyncadd [#allocation9], 0
      %s62 = sshll.u32 %s3, 4
      %s63 = int_to_ptr.hbm [resolvable:$true] %s62
      %s64 = sshll.u32 [#allocation8], 4
      %s65 = int_to_ptr.vmem [resolvable:$true] %s64
      %70 = dma.hbm_to_vmem [thread:$0]  %s63, 1024, %s65, [#allocation9], 64, 64, 4
    $region17: #{tpu_custom_call.1} parent=1 // pred_fallthru
      _
    // Predicated region
    $region18: #{tpu_custom_call.1} parent=1 // pred_check
      _
    $region19: #{tpu_custom_call.1} parent=1 // pred_check_branch
      %72 = sbr.rel (0) target = $region21
    $region20: #{tpu_custom_call.1} parent=1 // pred_region
      %74 = vsyncadd [#allocation9], 0
      %s75 = sshll.u32 %s4, 4
      %s76 = int_to_ptr.hbm [resolvable:$true] %s75
      %s77 = sshll.u32 [#allocation10], 4
      %s78 = int_to_ptr.vmem [resolvable:$true] %s77
      %83 = dma.hbm_to_vmem [thread:$0]  %s76, 1024, %s78, [#allocation9], 64, 64, 4
    $region21: #{tpu_custom_call.1} parent=1 // pred_fallthru
      _
    // Predicated region
    $region22: #{tpu_custom_call.1} parent=1 // pred_check
      _
    $region23: #{tpu_custom_call.1} parent=1 // pred_check_branch
      %85 = sbr.rel (0) target = $region25
    $region24: #{tpu_custom_call.1} parent=1 // pred_region
      %87 = vsyncadd [#allocation12], 0
      %s88 = sshll.u32 %s5, 4
      %s89 = int_to_ptr.hbm [resolvable:$true] %s88
      %s90 = sshll.u32 [#allocation11], 4
      %s91 = int_to_ptr.vmem [resolvable:$true] %s90
      %96 = dma.hbm_to_vmem [thread:$0]  %s89, 1024, %s91, [#allocation12], 64, 64, 4
    $region25: #{tpu_custom_call.1} parent=1 // pred_fallthru
      _
    // Predicated region
    $region26: #{tpu_custom_call.1} parent=1 // pred_check
      _
    $region27: #{tpu_custom_call.1} parent=1 // pred_check_branch
      %98 = sbr.rel (0) target = $region29
    $region28: #{tpu_custom_call.1} parent=1 // pred_region
      %100 = vsyncadd [#allocation12], 0
      %s101 = sshll.u32 %s6, 4
      %s102 = int_to_ptr.hbm [resolvable:$true] %s101
      %s103 = sshll.u32 [#allocation13], 4
      %s104 = int_to_ptr.vmem [resolvable:$true] %s103
      %109 = dma.hbm_to_vmem [thread:$0]  %s102, 1024, %s104, [#allocation12], 64, 64, 4
    $region29: #{tpu_custom_call.1} parent=1 // pred_fallthru
      _
    // Predicated region
    $region30: #{tpu_custom_call.1} parent=1 // pred_check
      _
    $region31: #{tpu_custom_call.1} parent=1 // pred_check_branch
      %111 = sbr.rel (0) target = $region33
    $region32: #{tpu_custom_call.1} parent=1 // pred_region
      %113 = vsyncadd [#allocation15], 0
      %s115 = sshll.u32 %s7, 4
      %s116 = int_to_ptr.hbm [resolvable:$true] %s115
      %s117 = sshll.u32 [#allocation14], 4
      %s118 = int_to_ptr.vmem [resolvable:$true] %s117
      %120 = dma.hbm_to_vmem [thread:$0]  %s116, 256, %s118, [#allocation15]
    $region33: #{tpu_custom_call.1} parent=1 // pred_fallthru
      _
    // Predicated region
    $region34: #{tpu_custom_call.1} parent=1 // pred_check
      _
    $region35: #{tpu_custom_call.1} parent=1 // pred_check_branch
      %122 = sbr.rel (0) target = $region37
    $region36: #{tpu_custom_call.1} parent=1 // pred_region
      %124 = dma.done [#allocation3], 256
    $region37: #{tpu_custom_call.1} parent=1 // pred_fallthru
      _
    // Predicated region
    $region38: #{tpu_custom_call.1} parent=1 // pred_check
      _
    $region39: #{tpu_custom_call.1} parent=1 // pred_check_branch
      %126 = sbr.rel (0) target = $region41
    $region40: #{tpu_custom_call.1} parent=1 // pred_region
      %128 = dma.done [#allocation6], 2048
    $region41: #{tpu_custom_call.1} parent=1 // pred_fallthru
      _
    // Predicated region
    $region42: #{tpu_custom_call.1} parent=1 // pred_check
      _
    $region43: #{tpu_custom_call.1} parent=1 // pred_check_branch
      %130 = sbr.rel (0) target = $region45
    $region44: #{tpu_custom_call.1} parent=1 // pred_region
      %132 = dma.done [#allocation6], 2048
    $region45: #{tpu_custom_call.1} parent=1 // pred_fallthru
      _
    // Predicated region
    $region46: #{tpu_custom_call.1} parent=1 // pred_check
      _
    $region47: #{tpu_custom_call.1} parent=1 // pred_check_branch
      %134 = sbr.rel (0) target = $region49
    $region48: #{tpu_custom_call.1} parent=1 // pred_region
      %136 = dma.done [#allocation9], 1024
    $region49: #{tpu_custom_call.1} parent=1 // pred_fallthru
      _
    // Predicated region
    $region50: #{tpu_custom_call.1} parent=1 // pred_check
      _
    $region51: #{tpu_custom_call.1} parent=1 // pred_check_branch
      %138 = sbr.rel (0) target = $region53
    $region52: #{tpu_custom_call.1} parent=1 // pred_region
      %140 = dma.done [#allocation9], 1024
    $region53: #{tpu_custom_call.1} parent=1 // pred_fallthru
      _
    // Predicated region
    $region54: #{tpu_custom_call.1} parent=1 // pred_check
      _
    $region55: #{tpu_custom_call.1} parent=1 // pred_check_branch
      %142 = sbr.rel (0) target = $region57
    $region56: #{tpu_custom_call.1} parent=1 // pred_region
      %144 = dma.done [#allocation12], 1024
    $region57: #{tpu_custom_call.1} parent=1 // pred_fallthru
      _
    // Predicated region
    $region58: #{tpu_custom_call.1} parent=1 // pred_check
      _
    $region59: #{tpu_custom_call.1} parent=1 // pred_check_branch
      %146 = sbr.rel (0) target = $region61
    $region60: #{tpu_custom_call.1} parent=1 // pred_region
      %148 = dma.done [#allocation12], 1024
    $region61: #{tpu_custom_call.1} parent=1 // pred_fallthru
      _
    // Predicated region
    $region62: #{tpu_custom_call.1} parent=1 // pred_check
      _
    $region63: #{tpu_custom_call.1} parent=1 // pred_check_branch
      %150 = sbr.rel (0) target = $region65
    $region64: #{tpu_custom_call.1} parent=1 // pred_region
      %152 = dma.done [#allocation15], 256
    $region65: #{tpu_custom_call.1} parent=1 // pred_fallthru
      _
    %v153 = vld [vmem:[#allocation14] ss:$0 sm:$0xff]
    %s154 = scalar_lea.vmem [#allocation14], 1
    %v155 = vld [vmem:[%s154] ss:$8 sm:$0x3]
    %v156 = vld [vmem:[#allocation14 + $0x2] ss:$0 sm:$0xff]
    %v157 = vld [vmem:[#allocation14 + $0x3] ss:$0 sm:$0xff]
    %v158 = vld [vmem:[#allocation14 + $0x4] ss:$0 sm:$0xff]
    %v159 = vld [vmem:[#allocation14 + $0x5] ss:$0 sm:$0xff]
    %v160 = vld [vmem:[#allocation2] sm:$0xff]
    %v161 = vld [vmem:[#allocation2 + $0x8] sm:$0xff]
    %v162 = vld [vmem:[#allocation5] sm:$0xff]
    %v163 = vld [vmem:[#allocation5 + $0x8] sm:$0xff]
    %v164 = vld [vmem:[#allocation5 + $0x10] sm:$0xff]
    %v165 = vld [vmem:[#allocation5 + $0x18] sm:$0xff]
    %v166 = vld [vmem:[#allocation5 + $0x20] sm:$0xff]
    %v167 = vld [vmem:[#allocation5 + $0x28] sm:$0xff]
    %v168 = vld [vmem:[#allocation5 + $0x30] sm:$0xff]
    %v169 = vld [vmem:[#allocation5 + $0x38] sm:$0xff]
    %v170 = vld [vmem:[#allocation5 + $0x40] sm:$0xff]
    %v171 = vld [vmem:[#allocation5 + $0x48] sm:$0xff]
    %v172 = vld [vmem:[#allocation5 + $0x50] sm:$0xff]
    %v173 = vld [vmem:[#allocation5 + $0x58] sm:$0xff]
    %v174 = vld [vmem:[#allocation5 + $0x60] sm:$0xff]
    %v175 = vld [vmem:[#allocation5 + $0x68] sm:$0xff]
    %v176 = vld [vmem:[#allocation5 + $0x70] sm:$0xff]
    %v177 = vld [vmem:[#allocation5 + $0x78] sm:$0xff]
    %178 = vmatpush.msra.mxu0 %v177
    %179 = vmatpush.msra.mxu0 %v176
    %180 = vmatpush.msra.mxu0 %v175
    %181 = vmatpush.msra.mxu0 %v174
    %182 = vmatpush.msra.mxu0 %v173
    %183 = vmatpush.msra.mxu0 %v172
    %184 = vmatpush.msra.mxu0 %v171
    %185 = vmatpush.msra.mxu0 %v170
    %186 = vmatpush.msra.mxu0 %v169
    %187 = vmatpush.msra.mxu0 %v168
    %188 = vmatpush.msra.mxu0 %v167
    %189 = vmatpush.msra.mxu0 %v166
    %190 = vmatpush.msra.mxu0 %v165
    %191 = vmatpush.msra.mxu0 %v164
    %192 = vmatpush.msra.mxu0 %v163
    %193 = vmatpush.msra.mxu0 %v162
    %194 = vmatmul.f32.gmra.mxu0 %v160
    %v195 = vpop.f32.mrf.mxu0
    %v196 = vadd.f32 %v153, %v195
    %197 = vmatmul.f32.gmra.mxu0 %v161
    %v198 = vpop.f32.mrf.mxu0
    %v199 = vadd.f32 %v153, %v198
    %200 = vdwg.mxu0
    %v201 = vmax.f32 %v196, 0.0
    %v202 = vmax.f32 %v199, 0.0
    %v203 = vpack.c.bf16 %v202, %v201
    %v204 = vld [vmem:[#allocation7] sm:$0xff]
    %v205 = vld [vmem:[#allocation7 + $0x8] sm:$0xff]
    %v206 = vld [vmem:[#allocation7 + $0x10] sm:$0xff]
    %v207 = vld [vmem:[#allocation7 + $0x18] sm:$0xff]
    %v208 = vld [vmem:[#allocation7 + $0x20] sm:$0xff]
    %v209 = vld [vmem:[#allocation7 + $0x28] sm:$0xff]
    %v210 = vld [vmem:[#allocation7 + $0x30] sm:$0xff]
    %v211 = vld [vmem:[#allocation7 + $0x38] sm:$0xff]
    %v212 = vld [vmem:[#allocation7 + $0x40] sm:$0xff]
    %v213 = vld [vmem:[#allocation7 + $0x48] sm:$0xff]
    %v214 = vld [vmem:[#allocation7 + $0x50] sm:$0xff]
    %v215 = vld [vmem:[#allocation7 + $0x58] sm:$0xff]
    %v216 = vld [vmem:[#allocation7 + $0x60] sm:$0xff]
    %v217 = vld [vmem:[#allocation7 + $0x68] sm:$0xff]
    %v218 = vld [vmem:[#allocation7 + $0x70] sm:$0xff]
    %v219 = vld [vmem:[#allocation7 + $0x78] sm:$0xff]
    %v221 = vperm.slane %v155, 0
    %v222 = vperm.slane %v155, 1
    %v241 = vunpack.c.l.b16 %v204
    %v242 = vunpack.c.h.b16 %v204
    %v243 = vunpack.c.l.b16 %v205
    %v244 = vunpack.c.h.b16 %v205
    %v245 = vunpack.c.l.b16 %v206
    %v246 = vunpack.c.h.b16 %v206
    %v247 = vunpack.c.l.b16 %v207
    %v248 = vunpack.c.h.b16 %v207
    %v249 = vunpack.c.l.b16 %v208
    %v250 = vunpack.c.h.b16 %v208
    %v251 = vunpack.c.l.b16 %v209
    %v252 = vunpack.c.h.b16 %v209
    %v253 = vunpack.c.l.b16 %v210
    %v254 = vunpack.c.h.b16 %v210
    %v255 = vunpack.c.l.b16 %v211
    %v256 = vunpack.c.h.b16 %v211
    %v257 = vunpack.c.l.b16 %v212
    %v258 = vunpack.c.h.b16 %v212
    %v259 = vunpack.c.l.b16 %v213
    %v260 = vunpack.c.h.b16 %v213
    %v261 = vunpack.c.l.b16 %v214
    %v262 = vunpack.c.h.b16 %v214
    %v263 = vunpack.c.l.b16 %v215
    %v264 = vunpack.c.h.b16 %v215
    %v265 = vunpack.c.l.b16 %v216
    %v266 = vunpack.c.h.b16 %v216
    %v267 = vunpack.c.l.b16 %v217
    %v268 = vunpack.c.h.b16 %v217
    %v269 = vunpack.c.l.b16 %v218
    %v270 = vunpack.c.h.b16 %v218
    %v271 = vunpack.c.l.b16 %v219
    %v272 = vunpack.c.h.b16 %v219
    %v273 = vpack.c.b16 %v243, %v241
    %v274 = vpack.c.b16 %v244, %v242
    %v275 = vpack.c.b16 %v247, %v245
    %v276 = vpack.c.b16 %v248, %v246
    %v277 = vpack.c.b16 %v251, %v249
    %v278 = vpack.c.b16 %v252, %v250
    %v279 = vpack.c.b16 %v255, %v253
    %v280 = vpack.c.b16 %v256, %v254
    %v281 = vpack.c.b16 %v259, %v257
    %v282 = vpack.c.b16 %v260, %v258
    %v283 = vpack.c.b16 %v263, %v261
    %v284 = vpack.c.b16 %v264, %v262
    %v285 = vpack.c.b16 %v267, %v265
    %v286 = vpack.c.b16 %v268, %v266
    %v287 = vpack.c.b16 %v271, %v269
    %v288 = vpack.c.b16 %v272, %v270
    %305 = vmatpush.bf16.msra.mxu0 %v287
    %306 = vmatpush.bf16.msra.mxu0 %v285
    %307 = vmatpush.bf16.msra.mxu0 %v283
    %308 = vmatpush.bf16.msra.mxu0 %v281
    %309 = vmatpush.bf16.msra.mxu0 %v279
    %310 = vmatpush.bf16.msra.mxu0 %v277
    %311 = vmatpush.bf16.msra.mxu0 %v275
    %312 = vmatpush.bf16.msra.mxu0 %v273
    %313 = vmatmul.bf16.gmra.mxu0 %v203
    %v314 = vpop.f32.mrf.mxu0
    %v315 = vadd.f32 %v221, %v314
    %v316 = vpop.f32.mrf.mxu0
    %v317 = vadd.f32 %v221, %v316
    %318 = vdwg.mxu0
    %319 = vmatpush.bf16.msra.mxu0 %v288
    %320 = vmatpush.bf16.msra.mxu0 %v286
    %321 = vmatpush.bf16.msra.mxu0 %v284
    %322 = vmatpush.bf16.msra.mxu0 %v282
    %323 = vmatpush.bf16.msra.mxu0 %v280
    %324 = vmatpush.bf16.msra.mxu0 %v278
    %325 = vmatpush.bf16.msra.mxu0 %v276
    %326 = vmatpush.bf16.msra.mxu0 %v274
    %327 = vmatmul.bf16.gmra.mxu0 %v203
    %v328 = vpop.f32.mrf.mxu0
    %v329 = vadd.f32 %v222, %v328
    %v330 = vpop.f32.mrf.mxu0
    %v331 = vadd.f32 %v222, %v330
    %332 = vdwg.mxu0
    %v333 = vmax.f32 %v315, 0.0
    %v334 = vmax.f32 %v329, 0.0
    %v335 = vmax.f32 %v317, 0.0
    %v336 = vmax.f32 %v331, 0.0
    %v337 = vpack.c.bf16 %v334, %v333
    %v338 = vpack.c.bf16 %v336, %v335
    %v339 = vld [vmem:[#allocation8] sm:$0xf]
    %v340 = vld [vmem:[#allocation8 + $0x4] sm:$0xf]
    %v341 = vld [vmem:[#allocation8 + $0x8] sm:$0xf]
    %v342 = vld [vmem:[#allocation8 + $0xc] sm:$0xf]
    %v343 = vld [vmem:[#allocation8 + $0x10] sm:$0xf]
    %v344 = vld [vmem:[#allocation8 + $0x14] sm:$0xf]
    %v345 = vld [vmem:[#allocation8 + $0x18] sm:$0xf]
    %v346 = vld [vmem:[#allocation8 + $0x1c] sm:$0xf]
    %v347 = vld [vmem:[#allocation8 + $0x20] sm:$0xf]
    %v348 = vld [vmem:[#allocation8 + $0x24] sm:$0xf]
    %v349 = vld [vmem:[#allocation8 + $0x28] sm:$0xf]
    %v350 = vld [vmem:[#allocation8 + $0x2c] sm:$0xf]
    %v351 = vld [vmem:[#allocation8 + $0x30] sm:$0xf]
    %v352 = vld [vmem:[#allocation8 + $0x34] sm:$0xf]
    %v353 = vld [vmem:[#allocation8 + $0x38] sm:$0xf]
    %v354 = vld [vmem:[#allocation8 + $0x3c] sm:$0xf]
    %v357 = vunpack.c.l.b16 %v337
    %v358 = vunpack.c.l.b16 %v338
    %v359 = vpack.c.b16 %v358, %v357
    %v377 = vunpack.c.l.b16 %v339
    %v378 = vunpack.c.l.b16 %v340
    %v379 = vunpack.c.l.b16 %v341
    %v380 = vunpack.c.l.b16 %v342
    %v381 = vunpack.c.l.b16 %v343
    %v382 = vunpack.c.l.b16 %v344
    %v383 = vunpack.c.l.b16 %v345
    %v384 = vunpack.c.l.b16 %v346
    %v385 = vunpack.c.l.b16 %v347
    %v386 = vunpack.c.l.b16 %v348
    %v387 = vunpack.c.l.b16 %v349
    %v388 = vunpack.c.l.b16 %v350
    %v389 = vunpack.c.l.b16 %v351
    %v390 = vunpack.c.l.b16 %v352
    %v391 = vunpack.c.l.b16 %v353
    %v392 = vunpack.c.l.b16 %v354
    %v393 = vpack.c.b16 %v378, %v377
    %v394 = vpack.c.b16 %v380, %v379
    %v395 = vpack.c.b16 %v382, %v381
    %v396 = vpack.c.b16 %v384, %v383
    %v397 = vpack.c.b16 %v386, %v385
    %v398 = vpack.c.b16 %v388, %v387
    %v399 = vpack.c.b16 %v390, %v389
    %v400 = vpack.c.b16 %v392, %v391
    %409 = vmatpush.bf16.msra.mxu0 %v400
    %410 = vmatpush.bf16.msra.mxu0 %v399
    %411 = vmatpush.bf16.msra.mxu0 %v398
    %412 = vmatpush.bf16.msra.mxu0 %v397
    %413 = vmatpush.bf16.msra.mxu0 %v396
    %414 = vmatpush.bf16.msra.mxu0 %v395
    %415 = vmatpush.bf16.msra.mxu0 %v394
    %416 = vmatpush.bf16.msra.mxu0 %v393
    %417 = vmatmul.bf16.gmra.mxu0 %v359
    %v418 = vpop.f32.mrf.mxu0
    %v419 = vadd.f32 %v156, %v418
    %v420 = vpop.f32.mrf.mxu0
    %v421 = vadd.f32 %v156, %v420
    %422 = vdwg.mxu0
    %v423 = vmax.f32 %v419, 0.0
    %v424 = vmax.f32 %v421, 0.0
    %v425 = vpack.c.bf16 %v424, %v423
    %v426 = vld [vmem:[#allocation10] sm:$0xf]
    %v427 = vld [vmem:[#allocation10 + $0x4] sm:$0xf]
    %v428 = vld [vmem:[#allocation10 + $0x8] sm:$0xf]
    %v429 = vld [vmem:[#allocation10 + $0xc] sm:$0xf]
    %v430 = vld [vmem:[#allocation10 + $0x10] sm:$0xf]
    %v431 = vld [vmem:[#allocation10 + $0x14] sm:$0xf]
    %v432 = vld [vmem:[#allocation10 + $0x18] sm:$0xf]
    %v433 = vld [vmem:[#allocation10 + $0x1c] sm:$0xf]
    %v434 = vld [vmem:[#allocation10 + $0x20] sm:$0xf]
    %v435 = vld [vmem:[#allocation10 + $0x24] sm:$0xf]
    %v436 = vld [vmem:[#allocation10 + $0x28] sm:$0xf]
    %v437 = vld [vmem:[#allocation10 + $0x2c] sm:$0xf]
    %v438 = vld [vmem:[#allocation10 + $0x30] sm:$0xf]
    %v439 = vld [vmem:[#allocation10 + $0x34] sm:$0xf]
    %v440 = vld [vmem:[#allocation10 + $0x38] sm:$0xf]
    %v441 = vld [vmem:[#allocation10 + $0x3c] sm:$0xf]
    %v442 = vunpack.c.h.b16 %v337
    %v443 = vunpack.c.h.b16 %v338
    %v444 = vpack.c.b16 %v443, %v442
    %v462 = vunpack.c.l.b16 %v426
    %v463 = vunpack.c.l.b16 %v427
    %v464 = vunpack.c.l.b16 %v428
    %v465 = vunpack.c.l.b16 %v429
    %v466 = vunpack.c.l.b16 %v430
    %v467 = vunpack.c.l.b16 %v431
    %v468 = vunpack.c.l.b16 %v432
    %v469 = vunpack.c.l.b16 %v433
    %v470 = vunpack.c.l.b16 %v434
    %v471 = vunpack.c.l.b16 %v435
    %v472 = vunpack.c.l.b16 %v436
    %v473 = vunpack.c.l.b16 %v437
    %v474 = vunpack.c.l.b16 %v438
    %v475 = vunpack.c.l.b16 %v439
    %v476 = vunpack.c.l.b16 %v440
    %v477 = vunpack.c.l.b16 %v441
    %v478 = vpack.c.b16 %v463, %v462
    %v479 = vpack.c.b16 %v465, %v464
    %v480 = vpack.c.b16 %v467, %v466
    %v481 = vpack.c.b16 %v469, %v468
    %v482 = vpack.c.b16 %v471, %v470
    %v483 = vpack.c.b16 %v473, %v472
    %v484 = vpack.c.b16 %v475, %v474
    %v485 = vpack.c.b16 %v477, %v476
    %494 = vmatpush.bf16.msra.mxu0 %v485
    %495 = vmatpush.bf16.msra.mxu0 %v484
    %496 = vmatpush.bf16.msra.mxu0 %v483
    %497 = vmatpush.bf16.msra.mxu0 %v482
    %498 = vmatpush.bf16.msra.mxu0 %v481
    %499 = vmatpush.bf16.msra.mxu0 %v480
    %500 = vmatpush.bf16.msra.mxu0 %v479
    %501 = vmatpush.bf16.msra.mxu0 %v478
    %502 = vmatmul.bf16.gmra.mxu0 %v444
    %v503 = vpop.f32.mrf.mxu0
    %v504 = vadd.f32 %v157, %v503
    %v505 = vpop.f32.mrf.mxu0
    %v506 = vadd.f32 %v157, %v505
    %507 = vdwg.mxu0
    %v508 = vmax.f32 %v504, 0.0
    %v509 = vmax.f32 %v506, 0.0
    %v510 = vpack.c.bf16 %v509, %v508
    %v511 = vld [vmem:[#allocation11] sm:$0xf]
    %v512 = vld [vmem:[#allocation11 + $0x4] sm:$0xf]
    %v513 = vld [vmem:[#allocation11 + $0x8] sm:$0xf]
    %v514 = vld [vmem:[#allocation11 + $0xc] sm:$0xf]
    %v515 = vld [vmem:[#allocation11 + $0x10] sm:$0xf]
    %v516 = vld [vmem:[#allocation11 + $0x14] sm:$0xf]
    %v517 = vld [vmem:[#allocation11 + $0x18] sm:$0xf]
    %v518 = vld [vmem:[#allocation11 + $0x1c] sm:$0xf]
    %v519 = vld [vmem:[#allocation11 + $0x20] sm:$0xf]
    %v520 = vld [vmem:[#allocation11 + $0x24] sm:$0xf]
    %v521 = vld [vmem:[#allocation11 + $0x28] sm:$0xf]
    %v522 = vld [vmem:[#allocation11 + $0x2c] sm:$0xf]
    %v523 = vld [vmem:[#allocation11 + $0x30] sm:$0xf]
    %v524 = vld [vmem:[#allocation11 + $0x34] sm:$0xf]
    %v525 = vld [vmem:[#allocation11 + $0x38] sm:$0xf]
    %v526 = vld [vmem:[#allocation11 + $0x3c] sm:$0xf]
    %v543 = vunpack.c.l.b16 %v511
    %v544 = vunpack.c.l.b16 %v512
    %v545 = vunpack.c.l.b16 %v513
    %v546 = vunpack.c.l.b16 %v514
    %v547 = vunpack.c.l.b16 %v515
    %v548 = vunpack.c.l.b16 %v516
    %v549 = vunpack.c.l.b16 %v517
    %v550 = vunpack.c.l.b16 %v518
    %v551 = vunpack.c.l.b16 %v519
    %v552 = vunpack.c.l.b16 %v520
    %v553 = vunpack.c.l.b16 %v521
    %v554 = vunpack.c.l.b16 %v522
    %v555 = vunpack.c.l.b16 %v523
    %v556 = vunpack.c.l.b16 %v524
    %v557 = vunpack.c.l.b16 %v525
    %v558 = vunpack.c.l.b16 %v526
    %v559 = vpack.c.b16 %v544, %v543
    %v560 = vpack.c.b16 %v546, %v545
    %v561 = vpack.c.b16 %v548, %v547
    %v562 = vpack.c.b16 %v550, %v549
    %v563 = vpack.c.b16 %v552, %v551
    %v564 = vpack.c.b16 %v554, %v553
    %v565 = vpack.c.b16 %v556, %v555
    %v566 = vpack.c.b16 %v558, %v557
    %575 = vmatpush.bf16.msra.mxu0 %v566
    %576 = vmatpush.bf16.msra.mxu0 %v565
    %577 = vmatpush.bf16.msra.mxu0 %v564
    %578 = vmatpush.bf16.msra.mxu0 %v563
    %579 = vmatpush.bf16.msra.mxu0 %v562
    %580 = vmatpush.bf16.msra.mxu0 %v561
    %581 = vmatpush.bf16.msra.mxu0 %v560
    %582 = vmatpush.bf16.msra.mxu0 %v559
    %583 = vmatmul.bf16.gmra.mxu0 %v425
    %v584 = vpop.f32.mrf.mxu0
    %v585 = vadd.f32 %v158, %v584
    %v586 = vpop.f32.mrf.mxu0
    %v587 = vadd.f32 %v158, %v586
    %588 = vdwg.mxu0
    %v589 = vld [vmem:[#allocation13] sm:$0xf]
    %v590 = vld [vmem:[#allocation13 + $0x4] sm:$0xf]
    %v591 = vld [vmem:[#allocation13 + $0x8] sm:$0xf]
    %v592 = vld [vmem:[#allocation13 + $0xc] sm:$0xf]
    %v593 = vld [vmem:[#allocation13 + $0x10] sm:$0xf]
    %v594 = vld [vmem:[#allocation13 + $0x14] sm:$0xf]
    %v595 = vld [vmem:[#allocation13 + $0x18] sm:$0xf]
    %v596 = vld [vmem:[#allocation13 + $0x1c] sm:$0xf]
    %v597 = vld [vmem:[#allocation13 + $0x20] sm:$0xf]
    %v598 = vld [vmem:[#allocation13 + $0x24] sm:$0xf]
    %v599 = vld [vmem:[#allocation13 + $0x28] sm:$0xf]
    %v600 = vld [vmem:[#allocation13 + $0x2c] sm:$0xf]
    %v601 = vld [vmem:[#allocation13 + $0x30] sm:$0xf]
    %v602 = vld [vmem:[#allocation13 + $0x34] sm:$0xf]
    %v603 = vld [vmem:[#allocation13 + $0x38] sm:$0xf]
    %v604 = vld [vmem:[#allocation13 + $0x3c] sm:$0xf]
    %v621 = vunpack.c.l.b16 %v589
    %v622 = vunpack.c.l.b16 %v590
    %v623 = vunpack.c.l.b16 %v591
    %v624 = vunpack.c.l.b16 %v592
    %v625 = vunpack.c.l.b16 %v593
    %v626 = vunpack.c.l.b16 %v594
    %v627 = vunpack.c.l.b16 %v595
    %v628 = vunpack.c.l.b16 %v596
    %v629 = vunpack.c.l.b16 %v597
    %v630 = vunpack.c.l.b16 %v598
    %v631 = vunpack.c.l.b16 %v599
    %v632 = vunpack.c.l.b16 %v600
    %v633 = vunpack.c.l.b16 %v601
    %v634 = vunpack.c.l.b16 %v602
    %v635 = vunpack.c.l.b16 %v603
    %v636 = vunpack.c.l.b16 %v604
    %v637 = vpack.c.b16 %v622, %v621
    %v638 = vpack.c.b16 %v624, %v623
    %v639 = vpack.c.b16 %v626, %v625
    %v640 = vpack.c.b16 %v628, %v627
    %v641 = vpack.c.b16 %v630, %v629
    %v642 = vpack.c.b16 %v632, %v631
    %v643 = vpack.c.b16 %v634, %v633
    %v644 = vpack.c.b16 %v636, %v635
    %653 = vmatpush.bf16.msra.mxu0 %v644
    %654 = vmatpush.bf16.msra.mxu0 %v643
    %655 = vmatpush.bf16.msra.mxu0 %v642
    %656 = vmatpush.bf16.msra.mxu0 %v641
    %657 = vmatpush.bf16.msra.mxu0 %v640
    %658 = vmatpush.bf16.msra.mxu0 %v639
    %659 = vmatpush.bf16.msra.mxu0 %v638
    %660 = vmatpush.bf16.msra.mxu0 %v637
    %661 = vmatmul.bf16.gmra.mxu0 %v510
    %v662 = vpop.f32.mrf.mxu0
    %v663 = vadd.f32 %v159, %v662
    %v664 = vpop.f32.mrf.mxu0
    %v665 = vadd.f32 %v159, %v664
    %666 = vdwg.mxu0
    %667 = vst [vmem:[#allocation16] sm:$0xff] %v585
    %668 = vst [vmem:[#allocation16 + $0x8] sm:$0xff] %v663
    %669 = vst [vmem:[#allocation16 + $0x10] sm:$0xff] %v587
    %670 = vst [vmem:[#allocation16 + $0x18] sm:$0xff] %v665
    // Predicated region
    $region66: #{tpu_custom_call.1} parent=1 // pred_check
      _
    $region67: #{tpu_custom_call.1} parent=1 // pred_check_branch
      %672 = sbr.rel (0) target = $region69
    $region68: #{tpu_custom_call.1} parent=1 // pred_region
      %674 = vsyncadd [#allocation4], 0
      %s675 = sshll.u32 [#allocation16], 4
      %s676 = int_to_ptr.vmem [resolvable:$true] %s675
      %s677 = sshll.u32 %s8, 4
      %s678 = int_to_ptr.hbm [resolvable:$true] %s677
      %683 = dma.vmem_to_hbm [thread:$0]  %s676, 512, %s678, [#allocation4], 256, 256, 16
    $region69: #{tpu_custom_call.1} parent=1 // pred_fallthru
      _
    // Predicated region
    $region70: #{tpu_custom_call.1} parent=1 // pred_check
      _
    $region71: #{tpu_custom_call.1} parent=1 // pred_check_branch
      %685 = sbr.rel (0) target = $region73
    $region72: #{tpu_custom_call.1} parent=1 // pred_region
      %687 = dma.done [#allocation4], 512
    $region73: #{tpu_custom_call.1} parent=1 // pred_fallthru
      _
    %688 = vsyncpa [#allocation3], 1
    %689 = vsyncpa [#allocation6], 1
    %690 = vsyncpa [#allocation9], 1
    %691 = vsyncpa [#allocation12], 1
    %692 = vsyncpa [#allocation15], 1
    %693 = vsyncpa [#allocation4], 1

// kernel: tpu_custom_call.1
$region0: #{tpu_custom_call.1}
  #allocation0 [shape = 'u32[]', space=smem, size = 0x4, offset = 0x4, fixed_abs, tag = 'smem constant byte address 0x4 - core index']
  #allocation1 [shape = 'u32[72,128]{1,0:T(1,128)}', space=vmem, size = 0x9000, scoped, tag = 'internal scratch']
  %s0 = inlined_call_operand.hbm [shape: f32[16,128], index: 0, kind: input, shape index: {}]
  %s1 = inlined_call_operand.hbm [shape: f32[128,128], index: 1, kind: input, shape index: {}]
  %s2 = inlined_call_operand.hbm [shape: bf16[128,256], index: 2, kind: input, shape index: {}]
  %s3 = inlined_call_operand.hbm [shape: bf16[128,128], index: 3, kind: input, shape index: {}]
  %s4 = inlined_call_operand.hbm [shape: bf16[128,128], index: 4, kind: input, shape index: {}]
  %s5 = inlined_call_operand.hbm [shape: bf16[128,128], index: 5, kind: input, shape index: {}]
  %s6 = inlined_call_operand.hbm [shape: bf16[128,128], index: 6, kind: input, shape index: {}]
  %s7 = inlined_call_operand.hbm [shape: f32[8,256], index: 7, kind: input, shape index: {}]
  %s8 = inlined_call_operand.hbm [shape: f32[16,256], index: 8, kind: output, shape index: {}]
  %s9 = sld [smem:[#allocation0]]
  $region74: #{tpu_custom_call.1} parent=0
    _
  %s11 = ssub.s32 1, %s9
  %s12 = scalar_select 0, %s11, %s9
  $region1: #{tpu_custom_call.1} parent=0
    #allocation2 [shape = 'u8[8192]{0}', space=vmem, size = 0x2000, scoped, tag = 'input window, operand 0, single buffered']
    #allocation3 [shape = 's32[1]{0}', space=sflag, size = 0x4, scoped, tag = 'scoped memory for tpu_custom_call.1']
    #allocation4 [shape = 's32[1]{0}', space=sflag, size = 0x4, scoped, tag = 'scoped memory for tpu_custom_call.1']
    #allocation5 [shape = 'u8[65536]{0}', space=vmem, size = 0x10000, scoped, tag = 'input window, operand 1, single buffered']
    #allocation6 [shape = 's32[1]{0}', space=sflag, size = 0x4, scoped, tag = 'scoped memory for tpu_custom_call.1']
    #allocation7 [shape = 'u8[65536]{0}', space=vmem, size = 0x10000, scoped, tag = 'input window, operand 2, single buffered']
    #allocation8 [shape = 'u8[32768]{0}', space=vmem, size = 0x8000, scoped, tag = 'input window, operand 3, single buffered']
    #allocation9 [shape = 's32[1]{0}', space=sflag, size = 0x4, scoped, tag = 'scoped memory for tpu_custom_call.1']
    #allocation10 [shape = 'u8[32768]{0}', space=vmem, size = 0x8000, scoped, tag = 'input window, operand 4, single buffered']
    #allocation11 [shape = 'u8[32768]{0}', space=vmem, size = 0x8000, scoped, tag = 'input window, operand 5, single buffered']
    #allocation12 [shape = 's32[1]{0}', space=sflag, size = 0x4, scoped, tag = 'scoped memory for tpu_custom_call.1']
    #allocation13 [shape = 'u8[32768]{0}', space=vmem, size = 0x8000, scoped, tag = 'input window, operand 6, single buffered']
    #allocation14 [shape = 'u8[8192]{0}', space=vmem, size = 0x2000, scoped, tag = 'input window, operand 7, single buffered']
    #allocation15 [shape = 's32[1]{0}', space=sflag, size = 0x4, scoped, tag = 'scoped memory for tpu_custom_call.1']
    #allocation16 [shape = 'u8[16384]{0}', space=vmem, size = 0x4000, scoped, tag = 'output window, operand 0, single buffered']
    %13 = vsyncpa [#allocation3], 0
    %14 = vsyncpa [#allocation6], 0
    %15 = vsyncpa [#allocation9], 0
    %16 = vsyncpa [#allocation12], 0
    %17 = vsyncpa [#allocation15], 0
    %18 = vsyncpa [#allocation4], 0
    // Predicated region
    $region2: #{tpu_custom_call.1} parent=1 // pred_check
      _
    $region3: #{tpu_custom_call.1} parent=1 // pred_check_branch
      %20 = sbr.rel (0) target = $region5
    $region4: #{tpu_custom_call.1} parent=1 // pred_region
      %22 = vsyncadd [#allocation3], 0
      %s23 = sshll.u32 %s0, 4
      %s24 = int_to_ptr.hbm [resolvable:$true] %s23
      %s25 = sshll.u32 [#allocation2], 4
      %s26 = int_to_ptr.vmem [resolvable:$true] %s25
      %31 = dma.hbm_to_vmem [thread:$0]  %s24, 256, %s26, [#allocation3], 128, 128, 8
    $region5: #{tpu_custom_call.1} parent=1 // pred_fallthru
      _
    // Predicated region
    $region6: #{tpu_custom_call.1} parent=1 // pred_check
      _
    $region7: #{tpu_custom_call.1} parent=1 // pred_check_branch
      %33 = sbr.rel (0) target = $region9
    $region8: #{tpu_custom_call.1} parent=1 // pred_region
      %35 = vsyncadd [#allocation6], 0
      %s36 = sshll.u32 %s1, 4
      %s37 = int_to_ptr.hbm [resolvable:$true] %s36
      %s38 = sshll.u32 [#allocation5], 4
      %s39 = int_to_ptr.vmem [resolvable:$true] %s38
      %44 = dma.hbm_to_vmem [thread:$0]  %s37, 2048, %s39, [#allocation6], 128, 128, 8
    $region9: #{tpu_custom_call.1} parent=1 // pred_fallthru
      _
    // Predicated region
    $region10: #{tpu_custom_call.1} parent=1 // pred_check
      _
    $region11: #{tpu_custom_call.1} parent=1 // pred_check_branch
      %46 = sbr.rel (0) target = $region13
    $region12: #{tpu_custom_call.1} parent=1 // pred_region
      %48 = vsyncadd [#allocation6], 0
      %s49 = sshll.u32 %s2, 4
      %s50 = int_to_ptr.hbm [resolvable:$true] %s49
      %s51 = sshll.u32 [#allocation7], 4
      %s52 = int_to_ptr.vmem [resolvable:$true] %s51
      %57 = dma.hbm_to_vmem [thread:$0]  %s50, 2048, %s52, [#allocation6], 128, 128, 8
    $region13: #{tpu_custom_call.1} parent=1 // pred_fallthru
      _
    // Predicated region
    $region14: #{tpu_custom_call.1} parent=1 // pred_check
      _
    $region15: #{tpu_custom_call.1} parent=1 // pred_check_branch
      %59 = sbr.rel (0) target = $region17
    $region16: #{tpu_custom_call.1} parent=1 // pred_region
      %61 = vsyncadd [#allocation9], 0
      %s62 = sshll.u32 %s3, 4
      %s63 = int_to_ptr.hbm [resolvable:$true] %s62
      %s64 = sshll.u32 [#allocation8], 4
      %s65 = int_to_ptr.vmem [resolvable:$true] %s64
      %70 = dma.hbm_to_vmem [thread:$0]  %s63, 1024, %s65, [#allocation9], 64, 64, 4
    $region17: #{tpu_custom_call.1} parent=1 // pred_fallthru
      _
    // Predicated region
    $region18: #{tpu_custom_call.1} parent=1 // pred_check
      _
    $region19: #{tpu_custom_call.1} parent=1 // pred_check_branch
      %72 = sbr.rel (0) target = $region21
    $region20: #{tpu_custom_call.1} parent=1 // pred_region
      %74 = vsyncadd [#allocation9], 0
      %s75 = sshll.u32 %s4, 4
      %s76 = int_to_ptr.hbm [resolvable:$true] %s75
      %s77 = sshll.u32 [#allocation10], 4
      %s78 = int_to_ptr.vmem [resolvable:$true] %s77
      %83 = dma.hbm_to_vmem [thread:$0]  %s76, 1024, %s78, [#allocation9], 64, 64, 4
    $region21: #{tpu_custom_call.1} parent=1 // pred_fallthru
      _
    // Predicated region
    $region22: #{tpu_custom_call.1} parent=1 // pred_check
      _
    $region23: #{tpu_custom_call.1} parent=1 // pred_check_branch
      %85 = sbr.rel (0) target = $region25
    $region24: #{tpu_custom_call.1} parent=1 // pred_region
      %87 = vsyncadd [#allocation12], 0
      %s88 = sshll.u32 %s5, 4
      %s89 = int_to_ptr.hbm [resolvable:$true] %s88
      %s90 = sshll.u32 [#allocation11], 4
      %s91 = int_to_ptr.vmem [resolvable:$true] %s90
      %96 = dma.hbm_to_vmem [thread:$0]  %s89, 1024, %s91, [#allocation12], 64, 64, 4
    $region25: #{tpu_custom_call.1} parent=1 // pred_fallthru
      _
    // Predicated region
    $region26: #{tpu_custom_call.1} parent=1 // pred_check
      _
    $region27: #{tpu_custom_call.1} parent=1 // pred_check_branch
      %98 = sbr.rel (0) target = $region29
    $region28: #{tpu_custom_call.1} parent=1 // pred_region
      %100 = vsyncadd [#allocation12], 0
      %s101 = sshll.u32 %s6, 4
      %s102 = int_to_ptr.hbm [resolvable:$true] %s101
      %s103 = sshll.u32 [#allocation13], 4
      %s104 = int_to_ptr.vmem [resolvable:$true] %s103
      %109 = dma.hbm_to_vmem [thread:$0]  %s102, 1024, %s104, [#allocation12], 64, 64, 4
    $region29: #{tpu_custom_call.1} parent=1 // pred_fallthru
      _
    // Predicated region
    $region30: #{tpu_custom_call.1} parent=1 // pred_check
      _
    $region31: #{tpu_custom_call.1} parent=1 // pred_check_branch
      %111 = sbr.rel (0) target = $region33
    $region32: #{tpu_custom_call.1} parent=1 // pred_region
      %113 = vsyncadd [#allocation15], 0
      %s115 = sshll.u32 %s7, 4
      %s116 = int_to_ptr.hbm [resolvable:$true] %s115
      %s117 = sshll.u32 [#allocation14], 4
      %s118 = int_to_ptr.vmem [resolvable:$true] %s117
      %120 = dma.hbm_to_vmem [thread:$0]  %s116, 256, %s118, [#allocation15]
    $region33: #{tpu_custom_call.1} parent=1 // pred_fallthru
      _
    // Predicated region
    $region34: #{tpu_custom_call.1} parent=1 // pred_check
      _
    $region35: #{tpu_custom_call.1} parent=1 // pred_check_branch
      %122 = sbr.rel (0) target = $region37
    $region36: #{tpu_custom_call.1} parent=1 // pred_region
      %124 = dma.done [#allocation3], 256
    $region37: #{tpu_custom_call.1} parent=1 // pred_fallthru
      _
    // Predicated region
    $region38: #{tpu_custom_call.1} parent=1 // pred_check
      _
    $region39: #{tpu_custom_call.1} parent=1 // pred_check_branch
      %126 = sbr.rel (0) target = $region41
    $region40: #{tpu_custom_call.1} parent=1 // pred_region
      %128 = dma.done [#allocation6], 2048
    $region41: #{tpu_custom_call.1} parent=1 // pred_fallthru
      _
    // Predicated region
    $region42: #{tpu_custom_call.1} parent=1 // pred_check
      _
    $region43: #{tpu_custom_call.1} parent=1 // pred_check_branch
      %130 = sbr.rel (0) target = $region45
    $region44: #{tpu_custom_call.1} parent=1 // pred_region
      %132 = dma.done [#allocation6], 2048
    $region45: #{tpu_custom_call.1} parent=1 // pred_fallthru
      _
    // Predicated region
    $region46: #{tpu_custom_call.1} parent=1 // pred_check
      _
    $region47: #{tpu_custom_call.1} parent=1 // pred_check_branch
      %134 = sbr.rel (0) target = $region49
    $region48: #{tpu_custom_call.1} parent=1 // pred_region
      %136 = dma.done [#allocation9], 1024
    $region49: #{tpu_custom_call.1} parent=1 // pred_fallthru
      _
    // Predicated region
    $region50: #{tpu_custom_call.1} parent=1 // pred_check
      _
    $region51: #{tpu_custom_call.1} parent=1 // pred_check_branch
      %138 = sbr.rel (0) target = $region53
    $region52: #{tpu_custom_call.1} parent=1 // pred_region
      %140 = dma.done [#allocation9], 1024
    $region53: #{tpu_custom_call.1} parent=1 // pred_fallthru
      _
    // Predicated region
    $region54: #{tpu_custom_call.1} parent=1 // pred_check
      _
    $region55: #{tpu_custom_call.1} parent=1 // pred_check_branch
      %142 = sbr.rel (0) target = $region57
    $region56: #{tpu_custom_call.1} parent=1 // pred_region
      %144 = dma.done [#allocation12], 1024
    $region57: #{tpu_custom_call.1} parent=1 // pred_fallthru
      _
    // Predicated region
    $region58: #{tpu_custom_call.1} parent=1 // pred_check
      _
    $region59: #{tpu_custom_call.1} parent=1 // pred_check_branch
      %146 = sbr.rel (0) target = $region61
    $region60: #{tpu_custom_call.1} parent=1 // pred_region
      %148 = dma.done [#allocation12], 1024
    $region61: #{tpu_custom_call.1} parent=1 // pred_fallthru
      _
    // Predicated region
    $region62: #{tpu_custom_call.1} parent=1 // pred_check
      _
    $region63: #{tpu_custom_call.1} parent=1 // pred_check_branch
      %150 = sbr.rel (0) target = $region65
    $region64: #{tpu_custom_call.1} parent=1 // pred_region
      %152 = dma.done [#allocation15], 256
    $region65: #{tpu_custom_call.1} parent=1 // pred_fallthru
      _
    %v153 = vld [vmem:[#allocation14] ss:$0 sm:$0xff]
    %s154 = scalar_lea.vmem [#allocation14], 1
    %v155 = vld [vmem:[%s154] ss:$8 sm:$0x3]
    %v156 = vld [vmem:[#allocation14 + $0x2] ss:$0 sm:$0xff]
    %v157 = vld [vmem:[#allocation14 + $0x3] ss:$0 sm:$0xff]
    %v158 = vld [vmem:[#allocation14 + $0x4] ss:$0 sm:$0xff]
    %v159 = vld [vmem:[#allocation14 + $0x5] ss:$0 sm:$0xff]
    %v160 = vld [vmem:[#allocation2] sm:$0xff]
    %v161 = vld [vmem:[#allocation2 + $0x8] sm:$0xff]
    %v162 = vld [vmem:[#allocation5] sm:$0xff]
    %v163 = vld [vmem:[#allocation5 + $0x8] sm:$0xff]
    %v164 = vld [vmem:[#allocation5 + $0x10] sm:$0xff]
    %v165 = vld [vmem:[#allocation5 + $0x18] sm:$0xff]
    %v166 = vld [vmem:[#allocation5 + $0x20] sm:$0xff]
    %v167 = vld [vmem:[#allocation5 + $0x28] sm:$0xff]
    %v168 = vld [vmem:[#allocation5 + $0x30] sm:$0xff]
    %v169 = vld [vmem:[#allocation5 + $0x38] sm:$0xff]
    %v170 = vld [vmem:[#allocation5 + $0x40] sm:$0xff]
    %v171 = vld [vmem:[#allocation5 + $0x48] sm:$0xff]
    %v172 = vld [vmem:[#allocation5 + $0x50] sm:$0xff]
    %v173 = vld [vmem:[#allocation5 + $0x58] sm:$0xff]
    %v174 = vld [vmem:[#allocation5 + $0x60] sm:$0xff]
    %v175 = vld [vmem:[#allocation5 + $0x68] sm:$0xff]
    %v176 = vld [vmem:[#allocation5 + $0x70] sm:$0xff]
    %v177 = vld [vmem:[#allocation5 + $0x78] sm:$0xff]
    %178 = vmatpush.msra.mxu0 %v177
    %179 = vmatpush.msra.mxu0 %v176
    %180 = vmatpush.msra.mxu0 %v175
    %181 = vmatpush.msra.mxu0 %v174
    %182 = vmatpush.msra.mxu0 %v173
    %183 = vmatpush.msra.mxu0 %v172
    %184 = vmatpush.msra.mxu0 %v171
    %185 = vmatpush.msra.mxu0 %v170
    %186 = vmatpush.msra.mxu0 %v169
    %187 = vmatpush.msra.mxu0 %v168
    %188 = vmatpush.msra.mxu0 %v167
    %189 = vmatpush.msra.mxu0 %v166
    %190 = vmatpush.msra.mxu0 %v165
    %191 = vmatpush.msra.mxu0 %v164
    %192 = vmatpush.msra.mxu0 %v163
    %193 = vmatpush.msra.mxu0 %v162
    %194 = vmatmul.f32.gmra.mxu0 %v160
    %v195 = vpop.f32.mrf.mxu0
    %v196 = vadd.f32 %v153, %v195
    %197 = vmatmul.f32.gmra.mxu0 %v161
    %v198 = vpop.f32.mrf.mxu0
    %v199 = vadd.f32 %v153, %v198
    %200 = vdwg.mxu0
    %v201 = vmax.f32 %v196, 0.0
    %v202 = vmax.f32 %v199, 0.0
    %v203 = vpack.c.bf16 %v202, %v201
    %v204 = vld [vmem:[#allocation7] sm:$0xff]
    %v205 = vld [vmem:[#allocation7 + $0x8] sm:$0xff]
    %v206 = vld [vmem:[#allocation7 + $0x10] sm:$0xff]
    %v207 = vld [vmem:[#allocation7 + $0x18] sm:$0xff]
    %v208 = vld [vmem:[#allocation7 + $0x20] sm:$0xff]
    %v209 = vld [vmem:[#allocation7 + $0x28] sm:$0xff]
    %v210 = vld [vmem:[#allocation7 + $0x30] sm:$0xff]
    %v211 = vld [vmem:[#allocation7 + $0x38] sm:$0xff]
    %v212 = vld [vmem:[#allocation7 + $0x40] sm:$0xff]
    %v213 = vld [vmem:[#allocation7 + $0x48] sm:$0xff]
    %v214 = vld [vmem:[#allocation7 + $0x50] sm:$0xff]
    %v215 = vld [vmem:[#allocation7 + $0x58] sm:$0xff]
    %v216 = vld [vmem:[#allocation7 + $0x60] sm:$0xff]
    %v217 = vld [vmem:[#allocation7 + $0x68] sm:$0xff]
    %v218 = vld [vmem:[#allocation7 + $0x70] sm:$0xff]
    %v219 = vld [vmem:[#allocation7 + $0x78] sm:$0xff]
    %v221 = vperm.slane %v155, 0
    %v222 = vperm.slane %v155, 1
    %v241 = vunpack.c.l.b16 %v204
    %v242 = vunpack.c.h.b16 %v204
    %v243 = vunpack.c.l.b16 %v205
    %v244 = vunpack.c.h.b16 %v205
    %v245 = vunpack.c.l.b16 %v206
    %v246 = vunpack.c.h.b16 %v206
    %v247 = vunpack.c.l.b16 %v207
    %v248 = vunpack.c.h.b16 %v207
    %v249 = vunpack.c.l.b16 %v208
    %v250 = vunpack.c.h.b16 %v208
    %v251 = vunpack.c.l.b16 %v209
    %v252 = vunpack.c.h.b16 %v209
    %v253 = vunpack.c.l.b16 %v210
    %v254 = vunpack.c.h.b16 %v210
    %v255 = vunpack.c.l.b16 %v211
    %v256 = vunpack.c.h.b16 %v211
    %v257 = vunpack.c.l.b16 %v212
    %v258 = vunpack.c.h.b16 %v212
    %v259 = vunpack.c.l.b16 %v213
    %v260 = vunpack.c.h.b16 %v213
    %v261 = vunpack.c.l.b16 %v214
    %v262 = vunpack.c.h.b16 %v214
    %v263 = vunpack.c.l.b16 %v215
    %v264 = vunpack.c.h.b16 %v215
    %v265 = vunpack.c.l.b16 %v216
    %v266 = vunpack.c.h.b16 %v216
    %v267 = vunpack.c.l.b16 %v217
    %v268 = vunpack.c.h.b16 %v217
    %v269 = vunpack.c.l.b16 %v218
    %v270 = vunpack.c.h.b16 %v218
    %v271 = vunpack.c.l.b16 %v219
    %v272 = vunpack.c.h.b16 %v219
    %v273 = vpack.c.b16 %v243, %v241
    %v274 = vpack.c.b16 %v244, %v242
    %v275 = vpack.c.b16 %v247, %v245
    %v276 = vpack.c.b16 %v248, %v246
    %v277 = vpack.c.b16 %v251, %v249
    %v278 = vpack.c.b16 %v252, %v250
    %v279 = vpack.c.b16 %v255, %v253
    %v280 = vpack.c.b16 %v256, %v254
    %v281 = vpack.c.b16 %v259, %v257
    %v282 = vpack.c.b16 %v260, %v258
    %v283 = vpack.c.b16 %v263, %v261
    %v284 = vpack.c.b16 %v264, %v262
    %v285 = vpack.c.b16 %v267, %v265
    %v286 = vpack.c.b16 %v268, %v266
    %v287 = vpack.c.b16 %v271, %v269
    %v288 = vpack.c.b16 %v272, %v270
    %305 = vmatpush.bf16.msra.mxu0 %v287
    %306 = vmatpush.bf16.msra.mxu0 %v285
    %307 = vmatpush.bf16.msra.mxu0 %v283
    %308 = vmatpush.bf16.msra.mxu0 %v281
    %309 = vmatpush.bf16.msra.mxu0 %v279
    %310 = vmatpush.bf16.msra.mxu0 %v277
    %311 = vmatpush.bf16.msra.mxu0 %v275
    %312 = vmatpush.bf16.msra.mxu0 %v273
    %313 = vmatmul.bf16.gmra.mxu0 %v203
    %v314 = vpop.f32.mrf.mxu0
    %v315 = vadd.f32 %v221, %v314
    %v316 = vpop.f32.mrf.mxu0
    %v317 = vadd.f32 %v221, %v316
    %318 = vdwg.mxu0
    %319 = vmatpush.bf16.msra.mxu0 %v288
    %320 = vmatpush.bf16.msra.mxu0 %v286
    %321 = vmatpush.bf16.msra.mxu0 %v284
    %322 = vmatpush.bf16.msra.mxu0 %v282
    %323 = vmatpush.bf16.msra.mxu0 %v280
    %324 = vmatpush.bf16.msra.mxu0 %v278
    %325 = vmatpush.bf16.msra.mxu0 %v276
    %326 = vmatpush.bf16.msra.mxu0 %v274
    %327 = vmatmul.bf16.gmra.mxu0 %v203
    %v328 = vpop.f32.mrf.mxu0
    %v329 = vadd.f32 %v222, %v328
    %v330 = vpop.f32.mrf.mxu0
    %v331 = vadd.f32 %v222, %v330
    %332 = vdwg.mxu0
    %v333 = vmax.f32 %v315, 0.0
    %v334 = vmax.f32 %v329, 0.0
    %v335 = vmax.f32 %v317, 0.0
    %v336 = vmax.f32 %v331, 0.0
    %v337 = vpack.c.bf16 %v334, %v333
    %v338 = vpack.c.bf16 %v336, %v335
    %v339 = vld [vmem:[#allocation8] sm:$0xf]
    %v340 = vld [vmem:[#allocation8 + $0x4] sm:$0xf]
    %v341 = vld [vmem:[#allocation8 + $0x8] sm:$0xf]
    %v342 = vld [vmem:[#allocation8 + $0xc] sm:$0xf]
    %v343 = vld [vmem:[#allocation8 + $0x10] sm:$0xf]
    %v344 = vld [vmem:[#allocation8 + $0x14] sm:$0xf]
    %v345 = vld [vmem:[#allocation8 + $0x18] sm:$0xf]
    %v346 = vld [vmem:[#allocation8 + $0x1c] sm:$0xf]
    %v347 = vld [vmem:[#allocation8 + $0x20] sm:$0xf]
    %v348 = vld [vmem:[#allocation8 + $0x24] sm:$0xf]
    %v349 = vld [vmem:[#allocation8 + $0x28] sm:$0xf]
    %v350 = vld [vmem:[#allocation8 + $0x2c] sm:$0xf]
    %v351 = vld [vmem:[#allocation8 + $0x30] sm:$0xf]
    %v352 = vld [vmem:[#allocation8 + $0x34] sm:$0xf]
    %v353 = vld [vmem:[#allocation8 + $0x38] sm:$0xf]
    %v354 = vld [vmem:[#allocation8 + $0x3c] sm:$0xf]
    %v357 = vunpack.c.l.b16 %v337
    %v358 = vunpack.c.l.b16 %v338
    %v359 = vpack.c.b16 %v358, %v357
    %v377 = vunpack.c.l.b16 %v339
    %v378 = vunpack.c.l.b16 %v340
    %v379 = vunpack.c.l.b16 %v341
    %v380 = vunpack.c.l.b16 %v342
    %v381 = vunpack.c.l.b16 %v343
    %v382 = vunpack.c.l.b16 %v344
    %v383 = vunpack.c.l.b16 %v345
    %v384 = vunpack.c.l.b16 %v346
    %v385 = vunpack.c.l.b16 %v347
    %v386 = vunpack.c.l.b16 %v348
    %v387 = vunpack.c.l.b16 %v349
    %v388 = vunpack.c.l.b16 %v350
    %v389 = vunpack.c.l.b16 %v351
    %v390 = vunpack.c.l.b16 %v352
    %v391 = vunpack.c.l.b16 %v353
    %v392 = vunpack.c.l.b16 %v354
    %v393 = vpack.c.b16 %v378, %v377
    %v394 = vpack.c.b16 %v380, %v379
    %v395 = vpack.c.b16 %v382, %v381
    %v396 = vpack.c.b16 %v384, %v383
    %v397 = vpack.c.b16 %v386, %v385
    %v398 = vpack.c.b16 %v388, %v387
    %v399 = vpack.c.b16 %v390, %v389
    %v400 = vpack.c.b16 %v392, %v391
    %409 = vmatpush.bf16.msra.mxu0 %v400
    %410 = vmatpush.bf16.msra.mxu0 %v399
    %411 = vmatpush.bf16.msra.mxu0 %v398
    %412 = vmatpush.bf16.msra.mxu0 %v397
    %413 = vmatpush.bf16.msra.mxu0 %v396
    %414 = vmatpush.bf16.msra.mxu0 %v395
    %415 = vmatpush.bf16.msra.mxu0 %v394
    %416 = vmatpush.bf16.msra.mxu0 %v393
    %417 = vmatmul.bf16.gmra.mxu0 %v359
    %v418 = vpop.f32.mrf.mxu0
    %v419 = vadd.f32 %v156, %v418
    %v420 = vpop.f32.mrf.mxu0
    %v421 = vadd.f32 %v156, %v420
    %422 = vdwg.mxu0
    %v423 = vmax.f32 %v419, 0.0
    %v424 = vmax.f32 %v421, 0.0
    %v425 = vpack.c.bf16 %v424, %v423
    %v426 = vld [vmem:[#allocation10] sm:$0xf]
    %v427 = vld [vmem:[#allocation10 + $0x4] sm:$0xf]
    %v428 = vld [vmem:[#allocation10 + $0x8] sm:$0xf]
    %v429 = vld [vmem:[#allocation10 + $0xc] sm:$0xf]
    %v430 = vld [vmem:[#allocation10 + $0x10] sm:$0xf]
    %v431 = vld [vmem:[#allocation10 + $0x14] sm:$0xf]
    %v432 = vld [vmem:[#allocation10 + $0x18] sm:$0xf]
    %v433 = vld [vmem:[#allocation10 + $0x1c] sm:$0xf]
    %v434 = vld [vmem:[#allocation10 + $0x20] sm:$0xf]
    %v435 = vld [vmem:[#allocation10 + $0x24] sm:$0xf]
    %v436 = vld [vmem:[#allocation10 + $0x28] sm:$0xf]
    %v437 = vld [vmem:[#allocation10 + $0x2c] sm:$0xf]
    %v438 = vld [vmem:[#allocation10 + $0x30] sm:$0xf]
    %v439 = vld [vmem:[#allocation10 + $0x34] sm:$0xf]
    %v440 = vld [vmem:[#allocation10 + $0x38] sm:$0xf]
    %v441 = vld [vmem:[#allocation10 + $0x3c] sm:$0xf]
    %v442 = vunpack.c.h.b16 %v337
    %v443 = vunpack.c.h.b16 %v338
    %v444 = vpack.c.b16 %v443, %v442
    %v462 = vunpack.c.l.b16 %v426
    %v463 = vunpack.c.l.b16 %v427
    %v464 = vunpack.c.l.b16 %v428
    %v465 = vunpack.c.l.b16 %v429
    %v466 = vunpack.c.l.b16 %v430
    %v467 = vunpack.c.l.b16 %v431
    %v468 = vunpack.c.l.b16 %v432
    %v469 = vunpack.c.l.b16 %v433
    %v470 = vunpack.c.l.b16 %v434
    %v471 = vunpack.c.l.b16 %v435
    %v472 = vunpack.c.l.b16 %v436
    %v473 = vunpack.c.l.b16 %v437
    %v474 = vunpack.c.l.b16 %v438
    %v475 = vunpack.c.l.b16 %v439
    %v476 = vunpack.c.l.b16 %v440
    %v477 = vunpack.c.l.b16 %v441
    %v478 = vpack.c.b16 %v463, %v462
    %v479 = vpack.c.b16 %v465, %v464
    %v480 = vpack.c.b16 %v467, %v466
    %v481 = vpack.c.b16 %v469, %v468
    %v482 = vpack.c.b16 %v471, %v470
    %v483 = vpack.c.b16 %v473, %v472
    %v484 = vpack.c.b16 %v475, %v474
    %v485 = vpack.c.b16 %v477, %v476
    %494 = vmatpush.bf16.msra.mxu0 %v485
    %495 = vmatpush.bf16.msra.mxu0 %v484
    %496 = vmatpush.bf16.msra.mxu0 %v483
    %497 = vmatpush.bf16.msra.mxu0 %v482
    %498 = vmatpush.bf16.msra.mxu0 %v481
    %499 = vmatpush.bf16.msra.mxu0 %v480
    %500 = vmatpush.bf16.msra.mxu0 %v479
    %501 = vmatpush.bf16.msra.mxu0 %v478
    %502 = vmatmul.bf16.gmra.mxu0 %v444
    %v503 = vpop.f32.mrf.mxu0
    %v504 = vadd.f32 %v157, %v503
    %v505 = vpop.f32.mrf.mxu0
    %v506 = vadd.f32 %v157, %v505
    %507 = vdwg.mxu0
    %v508 = vmax.f32 %v504, 0.0
    %v509 = vmax.f32 %v506, 0.0
    %v510 = vpack.c.bf16 %v509, %v508
    %v511 = vld [vmem:[#allocation11] sm:$0xf]
    %v512 = vld [vmem:[#allocation11 + $0x4] sm:$0xf]
    %v513 = vld [vmem:[#allocation11 + $0x8] sm:$0xf]
    %v514 = vld [vmem:[#allocation11 + $0xc] sm:$0xf]
    %v515 = vld [vmem:[#allocation11 + $0x10] sm:$0xf]
    %v516 = vld [vmem:[#allocation11 + $0x14] sm:$0xf]
    %v517 = vld [vmem:[#allocation11 + $0x18] sm:$0xf]
    %v518 = vld [vmem:[#allocation11 + $0x1c] sm:$0xf]
    %v519 = vld [vmem:[#allocation11 + $0x20] sm:$0xf]
    %v520 = vld [vmem:[#allocation11 + $0x24] sm:$0xf]
    %v521 = vld [vmem:[#allocation11 + $0x28] sm:$0xf]
    %v522 = vld [vmem:[#allocation11 + $0x2c] sm:$0xf]
    %v523 = vld [vmem:[#allocation11 + $0x30] sm:$0xf]
    %v524 = vld [vmem:[#allocation11 + $0x34] sm:$0xf]
    %v525 = vld [vmem:[#allocation11 + $0x38] sm:$0xf]
    %v526 = vld [vmem:[#allocation11 + $0x3c] sm:$0xf]
    %v543 = vunpack.c.l.b16 %v511
    %v544 = vunpack.c.l.b16 %v512
    %v545 = vunpack.c.l.b16 %v513
    %v546 = vunpack.c.l.b16 %v514
    %v547 = vunpack.c.l.b16 %v515
    %v548 = vunpack.c.l.b16 %v516
    %v549 = vunpack.c.l.b16 %v517
    %v550 = vunpack.c.l.b16 %v518
    %v551 = vunpack.c.l.b16 %v519
    %v552 = vunpack.c.l.b16 %v520
    %v553 = vunpack.c.l.b16 %v521
    %v554 = vunpack.c.l.b16 %v522
    %v555 = vunpack.c.l.b16 %v523
    %v556 = vunpack.c.l.b16 %v524
    %v557 = vunpack.c.l.b16 %v525
    %v558 = vunpack.c.l.b16 %v526
    %v559 = vpack.c.b16 %v544, %v543
    %v560 = vpack.c.b16 %v546, %v545
    %v561 = vpack.c.b16 %v548, %v547
    %v562 = vpack.c.b16 %v550, %v549
    %v563 = vpack.c.b16 %v552, %v551
    %v564 = vpack.c.b16 %v554, %v553
    %v565 = vpack.c.b16 %v556, %v555
    %v566 = vpack.c.b16 %v558, %v557
    %575 = vmatpush.bf16.msra.mxu0 %v566
    %576 = vmatpush.bf16.msra.mxu0 %v565
    %577 = vmatpush.bf16.msra.mxu0 %v564
    %578 = vmatpush.bf16.msra.mxu0 %v563
    %579 = vmatpush.bf16.msra.mxu0 %v562
    %580 = vmatpush.bf16.msra.mxu0 %v561
    %581 = vmatpush.bf16.msra.mxu0 %v560
    %582 = vmatpush.bf16.msra.mxu0 %v559
    %583 = vmatmul.bf16.gmra.mxu0 %v425
    %v584 = vpop.f32.mrf.mxu0
    %v585 = vadd.f32 %v158, %v584
    %v586 = vpop.f32.mrf.mxu0
    %v587 = vadd.f32 %v158, %v586
    %588 = vdwg.mxu0
    %v589 = vld [vmem:[#allocation13] sm:$0xf]
    %v590 = vld [vmem:[#allocation13 + $0x4] sm:$0xf]
    %v591 = vld [vmem:[#allocation13 + $0x8] sm:$0xf]
    %v592 = vld [vmem:[#allocation13 + $0xc] sm:$0xf]
    %v593 = vld [vmem:[#allocation13 + $0x10] sm:$0xf]
    %v594 = vld [vmem:[#allocation13 + $0x14] sm:$0xf]
    %v595 = vld [vmem:[#allocation13 + $0x18] sm:$0xf]
    %v596 = vld [vmem:[#allocation13 + $0x1c] sm:$0xf]
    %v597 = vld [vmem:[#allocation13 + $0x20] sm:$0xf]
    %v598 = vld [vmem:[#allocation13 + $0x24] sm:$0xf]
    %v599 = vld [vmem:[#allocation13 + $0x28] sm:$0xf]
    %v600 = vld [vmem:[#allocation13 + $0x2c] sm:$0xf]
    %v601 = vld [vmem:[#allocation13 + $0x30] sm:$0xf]
    %v602 = vld [vmem:[#allocation13 + $0x34] sm:$0xf]
    %v603 = vld [vmem:[#allocation13 + $0x38] sm:$0xf]
    %v604 = vld [vmem:[#allocation13 + $0x3c] sm:$0xf]
    %v621 = vunpack.c.l.b16 %v589
    %v622 = vunpack.c.l.b16 %v590
    %v623 = vunpack.c.l.b16 %v591
    %v624 = vunpack.c.l.b16 %v592
    %v625 = vunpack.c.l.b16 %v593
    %v626 = vunpack.c.l.b16 %v594
    %v627 = vunpack.c.l.b16 %v595
    %v628 = vunpack.c.l.b16 %v596
    %v629 = vunpack.c.l.b16 %v597
    %v630 = vunpack.c.l.b16 %v598
    %v631 = vunpack.c.l.b16 %v599
    %v632 = vunpack.c.l.b16 %v600
    %v633 = vunpack.c.l.b16 %v601
    %v634 = vunpack.c.l.b16 %v602
    %v635 = vunpack.c.l.b16 %v603
    %v636 = vunpack.c.l.b16 %v604
    %v637 = vpack.c.b16 %v622, %v621
    %v638 = vpack.c.b16 %v624, %v623
    %v639 = vpack.c.b16 %v626, %v625
    %v640 = vpack.c.b16 %v628, %v627
    %v641 = vpack.c.b16 %v630, %v629
    %v642 = vpack.c.b16 %v632, %v631
    %v643 = vpack.c.b16 %v634, %v633
    %v644 = vpack.c.b16 %v636, %v635
    %653 = vmatpush.bf16.msra.mxu0 %v644
    %654 = vmatpush.bf16.msra.mxu0 %v643
    %655 = vmatpush.bf16.msra.mxu0 %v642
    %656 = vmatpush.bf16.msra.mxu0 %v641
    %657 = vmatpush.bf16.msra.mxu0 %v640
    %658 = vmatpush.bf16.msra.mxu0 %v639
    %659 = vmatpush.bf16.msra.mxu0 %v638
    %660 = vmatpush.bf16.msra.mxu0 %v637
    %661 = vmatmul.bf16.gmra.mxu0 %v510
    %v662 = vpop.f32.mrf.mxu0
    %v663 = vadd.f32 %v159, %v662
    %v664 = vpop.f32.mrf.mxu0
    %v665 = vadd.f32 %v159, %v664
    %666 = vdwg.mxu0
    %667 = vst [vmem:[#allocation16] sm:$0xff] %v585
    %668 = vst [vmem:[#allocation16 + $0x8] sm:$0xff] %v663
    %669 = vst [vmem:[#allocation16 + $0x10] sm:$0xff] %v587
    %670 = vst [vmem:[#allocation16 + $0x18] sm:$0xff] %v665
    // Predicated region
    $region66: #{tpu_custom_call.1} parent=1 // pred_check
      _
    $region67: #{tpu_custom_call.1} parent=1 // pred_check_branch
      %672 = sbr.rel (0) target = $region69
    $region68: #{tpu_custom_call.1} parent=1 // pred_region
      %674 = vsyncadd [#allocation4], 0
      %s675 = sshll.u32 [#allocation16], 4
      %s676 = int_to_ptr.vmem [resolvable:$true] %s675
      %s677 = sshll.u32 %s8, 4
      %s678 = int_to_ptr.hbm [resolvable:$true] %s677
      %683 = dma.vmem_to_hbm [thread:$0]  %s676, 512, %s678, [#allocation4], 256, 256, 16
    $region69: #{tpu_custom_call.1} parent=1 // pred_fallthru
      _
    // Predicated region
    $region70: #{tpu_custom_call.1} parent=1 // pred_check
      _
    $region71: #{tpu_custom_call.1} parent=1 // pred_check_branch
      %685 = sbr.rel (0) target = $region73
    $region72: #{tpu_custom_call.1} parent=1 // pred_region
      %687 = dma.done [#allocation4], 512
    $region73: #{tpu_custom_call.1} parent=1 // pred_fallthru
      _
    %688 = vsyncpa [#allocation3], 1
    %689 = vsyncpa [#allocation6], 1
    %690 = vsyncpa [#allocation9], 1
    %691 = vsyncpa [#allocation12], 1
    %692 = vsyncpa [#allocation15], 1
    %693 = vsyncpa [#allocation4], 1

</llo_original>
